<compile_context>
chip_gen: v5e
topology: v5e:2x2
jax: 0.10.0
libtpu: 0.0.40
codegen_flags: <defaults>
</compile_context>

<pallas_src>
import functools

import jax
import jax.numpy as jnp
from jax.experimental import pallas as pl
from jax.experimental.pallas import tpu as pltpu

NUM_EXPERTS = 3
LANE = 128


def _round_up(x, m):
    return -(-x // m) * m


def _vmem_capacity_bytes():
    try:
        return int(pltpu.get_tpu_info().vmem_capacity_bytes)
    except Exception:
        return 64 * 1024 * 1024  # conservative (v7x-sized) fallback


def _choose_token_tile(T, D, Dp, wcols, out_bytes, vmem_bytes, requested):
    """Largest 8-aligned token tile whose working set fits ~70% of VMEM, then capped so
    the parallel grid axis has >= 2 steps (feeds both TensorCores on v7x)."""
    budget = int(vmem_bytes * 0.70)
    resident = D * wcols * 2 + LANE * Dp * 2            # single-buffered wf + padded biases

    def need(tm):
        return (resident
                + 2 * tm * D * 2                        # double-buffered bf16 input tiles
                + 2 * tm * Dp * out_bytes               # double-buffered output tiles
                + tm * wcols * 4                        # f32 fused matmul intermediate
                + 3 * tm * Dp * 4)                      # f32 accumulator / gating temps

    cands = [1024, 768, 512, 384, 256, 192, 128, 96, 64, 32, 16, 8]
    if requested is not None:
        cands = [int(requested)] + [c for c in cands if c < requested]
    tm = 8
    for c in cands:
        if c % 8 == 0 and need(c) <= budget:
            tm = c
            break
    if T <= 8:
        return 8
    if T < tm:
        tm = _round_up(T, 8)
    if T < 2 * tm:                                      # guarantee >= 2 grid steps
        tm = min(tm, _round_up(-(-T // 2), 8))
    return max(tm, 8)


def _moe_kernel(x_ref, wf_ref, be_ref, out_ref, stats_ref, *, TM, Dp, E, EP, T):
    """One token tile: fused [experts | gate] MXU push, top-1 combine, per-block stats."""
    x = x_ref[...]                                                      # (TM, D) bf16

    # Single lane-aligned MXU push: [we0|pad | we1|pad | we2|pad | wg|pad] -> f32.
    fused = jnp.dot(x, wf_ref[...], preferred_element_type=jnp.float32)  # (TM, E*Dp+EP)

    # ---- top-1 gating (deepspeed top1gating, no capacity drop), f32 VPU math ----
    col = jax.lax.broadcasted_iota(jnp.int32, (TM, EP), 1)
    valid_col = col < E
    logits = jnp.where(valid_col, fused[:, E * Dp:], jnp.float32(-1e30))  # (TM, EP)
    lmax = jnp.max(logits, axis=-1, keepdims=True)
    el = jnp.where(valid_col, jnp.exp(logits - lmax), 0.0)
    denom = jnp.sum(el, axis=-1, keepdims=True)
    rdenom = pl.reciprocal(denom, approx=False)     # exact: feeds the combined output
    probs = el * rdenom                             # softmax probs (0 on pad columns)
    gate = rdenom                                   # == probs[argmax] (its exp term == 1)

    # argmax-first one-hot via iota compare (no lane concatenates).
    colf = col.astype(jnp.float32)
    sel = jnp.min(jnp.where(logits == lmax, colf, jnp.float32(EP)),
                  axis=-1, keepdims=True)
    onehot = (colf == sel).astype(jnp.float32)      # (TM, EP)

    # ---- top-1 combine: out = gate * (x @ W_e* + b_e*) ----
    g_onehot = onehot * gate                        # (TM, EP)
    # Gated expert-bias term on the MXU (bias rows zero-padded to (EP, Dp)).
    y = jnp.dot(g_onehot.astype(jnp.bfloat16), be_ref[...],
                preferred_element_type=jnp.float32)  # (TM, Dp)
    for e in range(E):
        y = y + g_onehot[:, e:e + 1] * fused[:, e * Dp:(e + 1) * Dp]
    out_ref[...] = y.astype(out_ref.dtype)

    # ---- per-block load-balancing stats (reduced outside; parallel-grid safe) ----
    if T % TM != 0:  # mask the zero-padded tail rows out of the statistics
        row = jax.lax.broadcasted_iota(jnp.int32, (TM, 1), 0)
        valid_row = ((pl.program_id(0) * TM + row) < T).astype(jnp.float32)
        probs, onehot = probs * valid_row, onehot * valid_row
    sp = jnp.sum(probs, axis=0, keepdims=True)      # (1, EP)
    so = jnp.sum(onehot, axis=0, keepdims=True)     # (1, EP)
    stats_ref[...] = jnp.concatenate([sp, so], axis=0)[None]            # (1, 2, EP)


def type1_moe(x, wg, we, be, *, token_tile=None, out_dtype=None):
    """x: (B, L, N, D); wg: (D, E); we: (E, D, D) in (in, out) layout; be: (E, D).

    Returns (features, l_aux) matching Type1MoE.forward.  The module's permute/reshape
    is a pure per-token regrouping (the MoE is strictly row-wise), so it cancels and we
    run over all B*L*N tokens directly.
    """
    B, L, N, D = x.shape
    E = wg.shape[-1]
    T = B * L * N
    odt = jnp.dtype(out_dtype) if out_dtype is not None else jnp.dtype(x.dtype)

    Dp = _round_up(D, LANE)      # lane-aligned per-expert output block
    EP = _round_up(E, LANE)      # lane-aligned gate block
    wcols = E * Dp + EP

    vmem_cap = _vmem_capacity_bytes()
    TM = _choose_token_tile(T, D, Dp, wcols, odt.itemsize, vmem_cap, token_tile)
    Tp = _round_up(T, TM)
    G = Tp // TM
    vmem_limit = min(int(vmem_cap * 0.75), 112 * 1024 * 1024)

    # Flatten tokens (permute cancels) and pad to a whole number of tiles.
    xt = x.reshape(T, D)
    if Tp != T:
        xt = jnp.pad(xt, ((0, Tp - T), (0, 0)))
    xt_b = xt.astype(jnp.bfloat16)

    # Fused, lane-aligned weights: [we0|pad | we1|pad | we2|pad | wg|pad] -> (D, wcols).
    blocks = []
    for e in range(E):
        blk = we[e]                                  # (D, D), (in, out) layout
        if Dp != D:
            blk = jnp.pad(blk, ((0, 0), (0, Dp - D)))
        blocks.append(blk)
    gblk = jnp.pad(wg, ((0, 0), (0, EP - E))) if EP != E else wg
    wf_b = jnp.concatenate(blocks + [gblk], axis=1).astype(jnp.bfloat16)

    # Expert biases zero-padded to (EP, Dp) so the gated-bias dot is lane-aligned.
    be_b = jnp.zeros((EP, Dp), jnp.bfloat16).at[:E, :D].set(be.astype(jnp.bfloat16))

    kernel = functools.partial(_moe_kernel, TM=TM, Dp=Dp, E=E, EP=EP, T=T)

    def call(single_buffer_weights):
        res = ({"pipeline_mode": pl.Buffered(1)} if single_buffer_weights else {})
        return pl.pallas_call(
            kernel,
            out_shape=(jax.ShapeDtypeStruct((Tp, Dp), odt),
                       jax.ShapeDtypeStruct((G, 2, EP), jnp.float32)),
            grid_spec=pltpu.PrefetchScalarGridSpec(
                num_scalar_prefetch=0,
                grid=(G,),
                in_specs=[
                    pl.BlockSpec((TM, D), lambda g: (g, 0)),             # token tile
                    pl.BlockSpec((D, wcols), lambda g: (0, 0), **res),   # fused weights
                    pl.BlockSpec((EP, Dp), lambda g: (0, 0), **res),     # expert biases
                ],
                out_specs=(
                    pl.BlockSpec((TM, Dp), lambda g: (g, 0)),            # MoE output
                    pl.BlockSpec((1, 2, EP), lambda g: (g, 0, 0)),       # aux stats
                ),
            ),
            compiler_params=pltpu.CompilerParams(
                dimension_semantics=("parallel",),
                vmem_limit_bytes=vmem_limit),
        )(xt_b, wf_b, be_b)

    use_single = hasattr(pl, "Buffered")
    try:
        out_p, stats = call(use_single)
    except Exception:
        if not use_single:
            raise
        # Older jax without single-buffer pipeline_mode: default double-buffered weights.
        out_p, stats = call(False)

    out = out_p[:T, :D].reshape(B, L, N, D)
    totals = jnp.sum(stats, axis=0)                  # (2, EP)
    me = totals[0, :E] / T
    ce = totals[1, :E] / T
    l_aux = E * jnp.sum(me * ce)
    return out, l_aux


def reference(x, wg, we, be):
    """Pure-JAX reference of the module's forward (bf16 matmul inputs, f32 accumulation,
    matching the kernel's MXU precision)."""
    B, L, N, D = x.shape
    E = wg.shape[-1]
    xb = x.reshape(-1, D).astype(jnp.bfloat16)
    logits = jnp.dot(xb, wg.astype(jnp.bfloat16), preferred_element_type=jnp.float32)
    probs = jax.nn.softmax(logits, axis=-1)
    sel = jnp.argmax(probs, axis=-1)
    onehot = jax.nn.one_hot(sel, E, dtype=jnp.float32)
    gate = jnp.sum(probs * onehot, axis=-1, keepdims=True)
    eo = jnp.einsum("td,edo->teo", xb, we.astype(jnp.bfloat16),
                    preferred_element_type=jnp.float32) + be[None]
    y = gate * jnp.sum(onehot[..., None] * eo, axis=1)
    l_aux = E * jnp.sum(probs.mean(0) * onehot.mean(0))
    return y.reshape(B, L, N, D).astype(x.dtype), l_aux


if __name__ == "__main__":
    key = jax.random.PRNGKey(0)
    B, L, N, D = 2, 4, 16, 32        # tokens = B*L*N = 128, hidden = 32
    E = NUM_EXPERTS

    ks = jax.random.split(key, 4)
    x = jax.random.normal(ks[0], (B, L, N, D), jnp.float32)
    # Parameters generated directly in (in, out) math layout.
    # (Importing torch nn.Linear weights would require a transpose of .weight.)
    wg = 0.02 * jax.random.normal(ks[1], (D, E), jnp.float32)    # TopKGate Linear(D, 3), no bias
    we = 0.02 * jax.random.normal(ks[2], (E, D, D), jnp.float32)  # 3 expert Linear(D, D)
    be = 0.02 * jax.random.normal(ks[3], (E, D), jnp.float32)

    out, aux = type1_moe(x, wg, we, be)
    jax.block_until_ready((out, aux))

    ref_out, ref_aux = reference(x, wg, we, be)
    assert out.shape == (B, L, N, D)
    assert jnp.allclose(out, ref_out, atol=2e-3, rtol=2e-2), \
        float(jnp.max(jnp.abs(out - ref_out)))
    assert jnp.allclose(aux, ref_aux, atol=1e-2, rtol=2e-2), \
        (float(aux), float(ref_aux))

    print("KERNEL_OK")
</pallas_src>

<mosaic_0001>
module attributes {stable_mosaic.version = 11 : i64} {
  func.func @_moe_kernel(%arg0: i32, %arg1: memref<64x32xbf16, #tpu.memory_space<vmem>>, %arg2: memref<32x512xbf16, #tpu.memory_space<vmem>>, %arg3: memref<128x128xbf16, #tpu.memory_space<vmem>>, %arg4: memref<64x128xf32, #tpu.memory_space<vmem>>, %arg5: memref<1x2x128xf32, #tpu.memory_space<vmem>>) attributes {dimension_semantics = [#tpu.dimension_semantics<parallel>], iteration_bounds = array<i64: 2>, scalar_prefetch = 0 : i64, scratch_operands = 0 : i64, tpu.core_type = #tpu.core_type<tc>, window_params = [{transform_indices = @transform_0, window_bounds = array<i64: 64, 32>}, {pipeline_mode = #tpu.pipeline_mode<synchronous>, transform_indices = @transform_1, window_bounds = array<i64: 32, 512>}, {pipeline_mode = #tpu.pipeline_mode<synchronous>, transform_indices = @transform_2, window_bounds = array<i64: 128, 128>}, {transform_indices = @transform_3, window_bounds = array<i64: 64, 128>}, {transform_indices = @transform_4, window_bounds = array<i64: 1, 2, 128>}]} {
    %c0 = arith.constant 0 : index
    %c0_0 = arith.constant 0 : index
    %0 = vector.load %arg1[%c0, %c0_0] : memref<64x32xbf16, #tpu.memory_space<vmem>>, vector<64x32xbf16>
    %c0_1 = arith.constant 0 : index
    %c0_2 = arith.constant 0 : index
    %1 = vector.load %arg2[%c0_1, %c0_2] : memref<32x512xbf16, #tpu.memory_space<vmem>>, vector<32x512xbf16>
    %cst = arith.constant dense<0.000000e+00> : vector<64x512xf32>
    %2 = tpu.matmul %0, %1, %cst {dimension_numbers = #tpu.dot_dimension_numbers<[1], [0], [0], [1], [0, 0, 1, 1], [], []>} : vector<64x32xbf16>, vector<32x512xbf16>, vector<64x512xf32> -> vector<64x512xf32>
    %3 = tpu.iota {dimensions = array<i32: 1>} : vector<64x128xi32>
    %c3_i32 = arith.constant 3 : i32
    %4 = vector.broadcast %c3_i32 : i32 to vector<64x128xi32>
    %5 = arith.cmpi slt, %3, %4 : vector<64x128xi32>
    %6 = vector.extract_strided_slice %2 {offsets = [0, 384], sizes = [64, 128], strides = [1, 1]} : vector<64x512xf32> to vector<64x128xf32>
    %cst_3 = arith.constant -1.000000e+30 : f32
    %7 = vector.broadcast %cst_3 : f32 to vector<64x128xf32>
    %8 = arith.select %5, %6, %7 : vector<64x128xi1>, vector<64x128xf32>
    %cst_4 = arith.constant dense<0xFF800000> : vector<64xf32>
    %9 = vector.multi_reduction <maximumf>, %8, %cst_4 [1] : vector<64x128xf32> to vector<64xf32>
    %10 = vector.shape_cast %9 : vector<64xf32> to vector<64x1xf32>
    %11 = vector.broadcast %10 : vector<64x1xf32> to vector<64x128xf32>
    %12 = arith.subf %8, %11 : vector<64x128xf32>
    %13 = math.exp %12 : vector<64x128xf32>
    %cst_5 = arith.constant 0.000000e+00 : f32
    %14 = vector.broadcast %cst_5 : f32 to vector<64x128xf32>
    %15 = arith.select %5, %13, %14 : vector<64x128xi1>, vector<64x128xf32>
    %cst_6 = arith.constant dense<0.000000e+00> : vector<64xf32>
    %16 = vector.multi_reduction <add>, %15, %cst_6 [1] : vector<64x128xf32> to vector<64xf32>
    %17 = vector.shape_cast %16 : vector<64xf32> to vector<64x1xf32>
    %18 = tpu.reciprocal %17 : vector<64x1xf32> -> vector<64x1xf32>
    %19 = vector.broadcast %18 : vector<64x1xf32> to vector<64x128xf32>
    %20 = arith.mulf %15, %19 : vector<64x128xf32>
    %21 = arith.sitofp %3 : vector<64x128xi32> to vector<64x128xf32>
    %22 = vector.broadcast %10 : vector<64x1xf32> to vector<64x128xf32>
    %23 = arith.cmpf oeq, %8, %22 : vector<64x128xf32>
    %cst_7 = arith.constant 1.280000e+02 : f32
    %24 = vector.broadcast %cst_7 : f32 to vector<64x128xf32>
    %25 = arith.select %23, %21, %24 : vector<64x128xi1>, vector<64x128xf32>
    %cst_8 = arith.constant dense<0x7F800000> : vector<64xf32>
    %26 = vector.multi_reduction <minimumf>, %25, %cst_8 [1] : vector<64x128xf32> to vector<64xf32>
    %27 = vector.shape_cast %26 : vector<64xf32> to vector<64x1xf32>
    %28 = vector.broadcast %27 : vector<64x1xf32> to vector<64x128xf32>
    %29 = arith.cmpf oeq, %21, %28 : vector<64x128xf32>
    %30 = arith.extui %29 : vector<64x128xi1> to vector<64x128xi32>
    %31 = arith.sitofp %30 : vector<64x128xi32> to vector<64x128xf32>
    %32 = vector.broadcast %18 : vector<64x1xf32> to vector<64x128xf32>
    %33 = arith.mulf %31, %32 : vector<64x128xf32>
    %34 = arith.truncf %33 : vector<64x128xf32> to vector<64x128xbf16>
    %c0_9 = arith.constant 0 : index
    %c0_10 = arith.constant 0 : index
    %35 = vector.load %arg3[%c0_9, %c0_10] : memref<128x128xbf16, #tpu.memory_space<vmem>>, vector<128x128xbf16>
    %cst_11 = arith.constant dense<0.000000e+00> : vector<64x128xf32>
    %36 = tpu.matmul %34, %35, %cst_11 {dimension_numbers = #tpu.dot_dimension_numbers<[1], [0], [0], [1], [0, 0, 1, 1], [], []>} : vector<64x128xbf16>, vector<128x128xbf16>, vector<64x128xf32> -> vector<64x128xf32>
    %37 = vector.extract_strided_slice %33 {offsets = [0, 0], sizes = [64, 1], strides = [1, 1]} : vector<64x128xf32> to vector<64x1xf32>
    %38 = vector.extract_strided_slice %2 {offsets = [0, 0], sizes = [64, 128], strides = [1, 1]} : vector<64x512xf32> to vector<64x128xf32>
    %39 = vector.broadcast %37 : vector<64x1xf32> to vector<64x128xf32>
    %40 = arith.mulf %39, %38 : vector<64x128xf32>
    %41 = arith.addf %36, %40 : vector<64x128xf32>
    %42 = vector.extract_strided_slice %33 {offsets = [0, 1], sizes = [64, 1], strides = [1, 1]} : vector<64x128xf32> to vector<64x1xf32>
    %43 = vector.extract_strided_slice %2 {offsets = [0, 128], sizes = [64, 128], strides = [1, 1]} : vector<64x512xf32> to vector<64x128xf32>
    %44 = vector.broadcast %42 : vector<64x1xf32> to vector<64x128xf32>
    %45 = arith.mulf %44, %43 : vector<64x128xf32>
    %46 = arith.addf %41, %45 : vector<64x128xf32>
    %47 = vector.extract_strided_slice %33 {offsets = [0, 2], sizes = [64, 1], strides = [1, 1]} : vector<64x128xf32> to vector<64x1xf32>
    %48 = vector.extract_strided_slice %2 {offsets = [0, 256], sizes = [64, 128], strides = [1, 1]} : vector<64x512xf32> to vector<64x128xf32>
    %49 = vector.broadcast %47 : vector<64x1xf32> to vector<64x128xf32>
    %50 = arith.mulf %49, %48 : vector<64x128xf32>
    %51 = arith.addf %46, %50 : vector<64x128xf32>
    %c0_12 = arith.constant 0 : index
    %c0_13 = arith.constant 0 : index
    %52 = vector.load %arg4[%c0_12, %c0_13] : memref<64x128xf32, #tpu.memory_space<vmem>>, vector<64x128xf32>
    tpu.vector_store %arg4[%c0_12, %c0_13], %51 {strides = array<i32>} : memref<64x128xf32, #tpu.memory_space<vmem>>, vector<64x128xf32>,
    %cst_14 = arith.constant dense<0.000000e+00> : vector<128xf32>
    %53 = vector.multi_reduction <add>, %20, %cst_14 [0] : vector<64x128xf32> to vector<128xf32>
    %54 = vector.shape_cast %53 : vector<128xf32> to vector<1x128xf32>
    %cst_15 = arith.constant dense<0.000000e+00> : vector<128xf32>
    %55 = vector.multi_reduction <add>, %31, %cst_15 [0] : vector<64x128xf32> to vector<128xf32>
    %56 = vector.shape_cast %55 : vector<128xf32> to vector<1x128xf32>
    %57 = tpu.concatenate %54, %56 in 0 : vector<1x128xf32>, vector<1x128xf32> -> vector<2x128xf32>
    %58 = vector.shape_cast %57 : vector<2x128xf32> to vector<1x2x128xf32>
    %c0_16 = arith.constant 0 : index
    %c0_17 = arith.constant 0 : index
    %c0_18 = arith.constant 0 : index
    %59 = vector.load %arg5[%c0_16, %c0_17, %c0_18] : memref<1x2x128xf32, #tpu.memory_space<vmem>>, vector<1x2x128xf32>
    tpu.vector_store %arg5[%c0_16, %c0_17, %c0_18], %58 {strides = array<i32>} : memref<1x2x128xf32, #tpu.memory_space<vmem>>, vector<1x2x128xf32>,
    return
  }
  func.func @transform_0(%arg0: i32) -> (i32, i32) {
    %c0_i32 = arith.constant 0 : i32
    %c0_i32_0 = arith.constant 0 : i32
    return %arg0, %c0_i32 : i32, i32
  }
  func.func @transform_1(%arg0: i32) -> (i32, i32) {
    %c0_i32 = arith.constant 0 : i32
    %c0_i32_0 = arith.constant 0 : i32
    %c0_i32_1 = arith.constant 0 : i32
    return %c0_i32, %c0_i32_0 : i32, i32
  }
  func.func @transform_2(%arg0: i32) -> (i32, i32) {
    %c0_i32 = arith.constant 0 : i32
    %c0_i32_0 = arith.constant 0 : i32
    %c0_i32_1 = arith.constant 0 : i32
    return %c0_i32, %c0_i32_0 : i32, i32
  }
  func.func @transform_3(%arg0: i32) -> (i32, i32) {
    %c0_i32 = arith.constant 0 : i32
    %c0_i32_0 = arith.constant 0 : i32
    return %arg0, %c0_i32 : i32, i32
  }
  func.func @transform_4(%arg0: i32) -> (i32, i32, i32) {
    %c0_i32 = arith.constant 0 : i32
    %c0_i32_0 = arith.constant 0 : i32
    %c0_i32_1 = arith.constant 0 : i32
    return %arg0, %c0_i32, %c0_i32_0 : i32, i32, i32
  }
}

module attributes {stable_mosaic.version = 11 : i64} {
  func.func @_moe_kernel(%arg0: i32, %arg1: memref<64x32xbf16, #tpu.memory_space<vmem>>, %arg2: memref<32x512xbf16, #tpu.memory_space<vmem>>, %arg3: memref<128x128xbf16, #tpu.memory_space<vmem>>, %arg4: memref<64x128xf32, #tpu.memory_space<vmem>>, %arg5: memref<1x2x128xf32, #tpu.memory_space<vmem>>) attributes {dimension_semantics = [#tpu.dimension_semantics<parallel>], iteration_bounds = array<i64: 2>, scalar_prefetch = 0 : i64, scratch_operands = 0 : i64, tpu.core_type = #tpu.core_type<tc>, window_params = [{transform_indices = @transform_0, window_bounds = array<i64: 64, 32>}, {pipeline_mode = #tpu.pipeline_mode<synchronous>, transform_indices = @transform_1, window_bounds = array<i64: 32, 512>}, {pipeline_mode = #tpu.pipeline_mode<synchronous>, transform_indices = @transform_2, window_bounds = array<i64: 128, 128>}, {transform_indices = @transform_3, window_bounds = array<i64: 64, 128>}, {transform_indices = @transform_4, window_bounds = array<i64: 1, 2, 128>}]} {
    %c0 = arith.constant 0 : index
    %c0_0 = arith.constant 0 : index
    %0 = vector.load %arg1[%c0, %c0_0] : memref<64x32xbf16, #tpu.memory_space<vmem>>, vector<64x32xbf16>
    %c0_1 = arith.constant 0 : index
    %c0_2 = arith.constant 0 : index
    %1 = vector.load %arg2[%c0_1, %c0_2] : memref<32x512xbf16, #tpu.memory_space<vmem>>, vector<32x512xbf16>
    %cst = arith.constant dense<0.000000e+00> : vector<64x512xf32>
    %2 = tpu.matmul %0, %1, %cst {dimension_numbers = #tpu.dot_dimension_numbers<[1], [0], [0], [1], [0, 0, 1, 1], [], []>} : vector<64x32xbf16>, vector<32x512xbf16>, vector<64x512xf32> -> vector<64x512xf32>
    %3 = tpu.iota {dimensions = array<i32: 1>} : vector<64x128xi32>
    %c3_i32 = arith.constant 3 : i32
    %4 = vector.broadcast %c3_i32 : i32 to vector<64x128xi32>
    %5 = arith.cmpi slt, %3, %4 : vector<64x128xi32>
    %6 = vector.extract_strided_slice %2 {offsets = [0, 384], sizes = [64, 128], strides = [1, 1]} : vector<64x512xf32> to vector<64x128xf32>
    %cst_3 = arith.constant -1.000000e+30 : f32
    %7 = vector.broadcast %cst_3 : f32 to vector<64x128xf32>
    %8 = arith.select %5, %6, %7 : vector<64x128xi1>, vector<64x128xf32>
    %cst_4 = arith.constant dense<0xFF800000> : vector<64xf32>
    %9 = vector.multi_reduction <maximumf>, %8, %cst_4 [1] : vector<64x128xf32> to vector<64xf32>
    %10 = vector.shape_cast %9 : vector<64xf32> to vector<64x1xf32>
    %11 = vector.broadcast %10 : vector<64x1xf32> to vector<64x128xf32>
    %12 = arith.subf %8, %11 : vector<64x128xf32>
    %13 = math.exp %12 : vector<64x128xf32>
    %cst_5 = arith.constant 0.000000e+00 : f32
    %14 = vector.broadcast %cst_5 : f32 to vector<64x128xf32>
    %15 = arith.select %5, %13, %14 : vector<64x128xi1>, vector<64x128xf32>
    %cst_6 = arith.constant dense<0.000000e+00> : vector<64xf32>
    %16 = vector.multi_reduction <add>, %15, %cst_6 [1] : vector<64x128xf32> to vector<64xf32>
    %17 = vector.shape_cast %16 : vector<64xf32> to vector<64x1xf32>
    %18 = tpu.reciprocal %17 : vector<64x1xf32> -> vector<64x1xf32>
    %19 = vector.broadcast %18 : vector<64x1xf32> to vector<64x128xf32>
    %20 = arith.mulf %15, %19 : vector<64x128xf32>
    %21 = arith.sitofp %3 : vector<64x128xi32> to vector<64x128xf32>
    %22 = vector.broadcast %10 : vector<64x1xf32> to vector<64x128xf32>
    %23 = arith.cmpf oeq, %8, %22 : vector<64x128xf32>
    %cst_7 = arith.constant 1.280000e+02 : f32
    %24 = vector.broadcast %cst_7 : f32 to vector<64x128xf32>
    %25 = arith.select %23, %21, %24 : vector<64x128xi1>, vector<64x128xf32>
    %cst_8 = arith.constant dense<0x7F800000> : vector<64xf32>
    %26 = vector.multi_reduction <minimumf>, %25, %cst_8 [1] : vector<64x128xf32> to vector<64xf32>
    %27 = vector.shape_cast %26 : vector<64xf32> to vector<64x1xf32>
    %28 = vector.broadcast %27 : vector<64x1xf32> to vector<64x128xf32>
    %29 = arith.cmpf oeq, %21, %28 : vector<64x128xf32>
    %30 = arith.extui %29 : vector<64x128xi1> to vector<64x128xi32>
    %31 = arith.sitofp %30 : vector<64x128xi32> to vector<64x128xf32>
    %32 = vector.broadcast %18 : vector<64x1xf32> to vector<64x128xf32>
    %33 = arith.mulf %31, %32 : vector<64x128xf32>
    %34 = arith.truncf %33 : vector<64x128xf32> to vector<64x128xbf16>
    %c0_9 = arith.constant 0 : index
    %c0_10 = arith.constant 0 : index
    %35 = vector.load %arg3[%c0_9, %c0_10] : memref<128x128xbf16, #tpu.memory_space<vmem>>, vector<128x128xbf16>
    %cst_11 = arith.constant dense<0.000000e+00> : vector<64x128xf32>
    %36 = tpu.matmul %34, %35, %cst_11 {dimension_numbers = #tpu.dot_dimension_numbers<[1], [0], [0], [1], [0, 0, 1, 1], [], []>} : vector<64x128xbf16>, vector<128x128xbf16>, vector<64x128xf32> -> vector<64x128xf32>
    %37 = vector.extract_strided_slice %33 {offsets = [0, 0], sizes = [64, 1], strides = [1, 1]} : vector<64x128xf32> to vector<64x1xf32>
    %38 = vector.extract_strided_slice %2 {offsets = [0, 0], sizes = [64, 128], strides = [1, 1]} : vector<64x512xf32> to vector<64x128xf32>
    %39 = vector.broadcast %37 : vector<64x1xf32> to vector<64x128xf32>
    %40 = arith.mulf %39, %38 : vector<64x128xf32>
    %41 = arith.addf %36, %40 : vector<64x128xf32>
    %42 = vector.extract_strided_slice %33 {offsets = [0, 1], sizes = [64, 1], strides = [1, 1]} : vector<64x128xf32> to vector<64x1xf32>
    %43 = vector.extract_strided_slice %2 {offsets = [0, 128], sizes = [64, 128], strides = [1, 1]} : vector<64x512xf32> to vector<64x128xf32>
    %44 = vector.broadcast %42 : vector<64x1xf32> to vector<64x128xf32>
    %45 = arith.mulf %44, %43 : vector<64x128xf32>
    %46 = arith.addf %41, %45 : vector<64x128xf32>
    %47 = vector.extract_strided_slice %33 {offsets = [0, 2], sizes = [64, 1], strides = [1, 1]} : vector<64x128xf32> to vector<64x1xf32>
    %48 = vector.extract_strided_slice %2 {offsets = [0, 256], sizes = [64, 128], strides = [1, 1]} : vector<64x512xf32> to vector<64x128xf32>
    %49 = vector.broadcast %47 : vector<64x1xf32> to vector<64x128xf32>
    %50 = arith.mulf %49, %48 : vector<64x128xf32>
    %51 = arith.addf %46, %50 : vector<64x128xf32>
    %c0_12 = arith.constant 0 : index
    %c0_13 = arith.constant 0 : index
    %52 = vector.load %arg4[%c0_12, %c0_13] : memref<64x128xf32, #tpu.memory_space<vmem>>, vector<64x128xf32>
    tpu.vector_store %arg4[%c0_12, %c0_13], %51 {strides = array<i32>} : memref<64x128xf32, #tpu.memory_space<vmem>>, vector<64x128xf32>,
    %cst_14 = arith.constant dense<0.000000e+00> : vector<128xf32>
    %53 = vector.multi_reduction <add>, %20, %cst_14 [0] : vector<64x128xf32> to vector<128xf32>
    %54 = vector.shape_cast %53 : vector<128xf32> to vector<1x128xf32>
    %cst_15 = arith.constant dense<0.000000e+00> : vector<128xf32>
    %55 = vector.multi_reduction <add>, %31, %cst_15 [0] : vector<64x128xf32> to vector<128xf32>
    %56 = vector.shape_cast %55 : vector<128xf32> to vector<1x128xf32>
    %57 = tpu.concatenate %54, %56 in 0 : vector<1x128xf32>, vector<1x128xf32> -> vector<2x128xf32>
    %58 = vector.shape_cast %57 : vector<2x128xf32> to vector<1x2x128xf32>
    %c0_16 = arith.constant 0 : index
    %c0_17 = arith.constant 0 : index
    %c0_18 = arith.constant 0 : index
    %59 = vector.load %arg5[%c0_16, %c0_17, %c0_18] : memref<1x2x128xf32, #tpu.memory_space<vmem>>, vector<1x2x128xf32>
    tpu.vector_store %arg5[%c0_16, %c0_17, %c0_18], %58 {strides = array<i32>} : memref<1x2x128xf32, #tpu.memory_space<vmem>>, vector<1x2x128xf32>,
    return
  }
  func.func @transform_0(%arg0: i32) -> (i32, i32) {
    %c0_i32 = arith.constant 0 : i32
    %c0_i32_0 = arith.constant 0 : i32
    return %arg0, %c0_i32 : i32, i32
  }
  func.func @transform_1(%arg0: i32) -> (i32, i32) {
    %c0_i32 = arith.constant 0 : i32
    %c0_i32_0 = arith.constant 0 : i32
    %c0_i32_1 = arith.constant 0 : i32
    return %c0_i32, %c0_i32_0 : i32, i32
  }
  func.func @transform_2(%arg0: i32) -> (i32, i32) {
    %c0_i32 = arith.constant 0 : i32
    %c0_i32_0 = arith.constant 0 : i32
    %c0_i32_1 = arith.constant 0 : i32
    return %c0_i32, %c0_i32_0 : i32, i32
  }
  func.func @transform_3(%arg0: i32) -> (i32, i32) {
    %c0_i32 = arith.constant 0 : i32
    %c0_i32_0 = arith.constant 0 : i32
    return %arg0, %c0_i32 : i32, i32
  }
  func.func @transform_4(%arg0: i32) -> (i32, i32, i32) {
    %c0_i32 = arith.constant 0 : i32
    %c0_i32_0 = arith.constant 0 : i32
    %c0_i32_1 = arith.constant 0 : i32
    return %arg0, %c0_i32, %c0_i32_0 : i32, i32, i32
  }
}

</mosaic_0001>

<llo_original>
// kernel: tpu_custom_call.1
$region0: #{tpu_custom_call.1}
  #allocation0 [shape = 'u32[]', space=smem, size = 0x4, offset = 0x4, fixed_abs, tag = 'smem constant byte address 0x4 - core index']
  #allocation1 [shape = 'u32[72,128]{1,0:T(1,128)}', space=vmem, size = 0x9000, scoped, tag = 'internal scratch']
  %s0 = inlined_call_operand.vmem [shape: bf16[128,32], index: 0, kind: input, shape index: {}]
  %s1 = inlined_call_operand.vmem [shape: bf16[32,512], index: 1, kind: input, shape index: {}]
  %s2 = inlined_call_operand.hbm [shape: bf16[128,128], index: 2, kind: input, shape index: {}]
  %s3 = inlined_call_operand.hbm [shape: f32[128,128], index: 3, kind: output, shape index: {0}]
  %s4 = inlined_call_operand.hbm [shape: f32[2,2,128], index: 4, kind: output, shape index: {1}]
  %5 = xla_tuple %s3, %s4
  %s6 = sld [smem:[#allocation0]]
  $region57: #{tpu_custom_call.1} parent=0
    _
  %s8 = ssub.s32 1, %s6
  %s9 = scalar_select 0, %s8, %s6
  $region1: #{tpu_custom_call.1} parent=0
    #allocation2 [shape = 'u8[32768]{0}', space=vmem, size = 0x8000, scoped, tag = 'input window, operand 2, single buffered']
    #allocation3 [shape = 's32[2]{0}', space=sflag, size = 0x8, scoped, tag = 'scoped memory for tpu_custom_call.1']
    #allocation4 [shape = 's32[2]{0}', space=sflag, size = 0x8, scoped, tag = 'scoped memory for tpu_custom_call.1']
    #allocation5 [shape = 'u8[65536]{0}', space=vmem, size = 0x10000, scoped, tag = 'output window, operand 0']
    #allocation6 [shape = 'u8[2048]{0}', space=vmem, size = 0x800, scoped, tag = 'output window, operand 1']
    #allocation7 [shape = 's32[2]{0}', space=sflag, size = 0x8, scoped, tag = 'scoped memory for tpu_custom_call.1']
    %10 = vsyncpa [#allocation3], 0
    %11 = vsyncpa [#allocation4], 0
    %s12 = scalar_lea.sflag [#allocation4], 1
    %13 = vsyncpa %s12, 0
    %14 = vsyncpa [#allocation7], 0
    %s15 = scalar_lea.sflag [#allocation7], 1
    %16 = vsyncpa %s15, 0
    loop: start=0, step=1, limit=4
    $region2: #{tpu_custom_call.1} parent=1 // loop_pre_header
      _
    $region3: #{tpu_custom_call.1} parent=1 // loop_header
      %s18 = sphi 0, %s22
      %p19 = scmp.ge.s32.totalorder %s18, 4
      %s28 = sphi 0, %s30
      %s31 = sphi 0, %s28
      %s32 = sphi 0, %s31
      %s48 = sphi 0, %s32
      %s52 = sphi 0, %s52
      %s54 = sphi 0, %s52
      %s55 = sphi 0, %s54
      %s69 = sphi 0, %s55
      %s73 = sphi 0, %s73
      %s75 = sphi 0, %s73
      %s76 = sphi 0, %s75
      %s90 = sphi 0, %s76
      %s96 = sphi 0, %s98
      %s99 = sphi 0, %s96
      %s100 = sphi 0, %s99
      %s116 = sphi 0, %s100
      %s122 = sphi 0, %s124
      %s125 = sphi 0, %s122
      %s126 = sphi 0, %s125
      %s142 = sphi 0, %s126
    $region4: #{tpu_custom_call.1} parent=1 // loop_header_branch
      %21 = sbr.rel (%p19) target = $region8
    $region5: #{tpu_custom_call.1} parent=1 // loop_body
      %s23 = ssub.s32 %s18, 1
      %s24 = ssub.s32 %s18, 2
      %s25 = sadd.s32 %s18, 1
      %s26 = ssub.s32 %s18, %s25
      %p27 = scmp.eq.s32.totalorder %s26, 0
      %s29 = sadd.s32 %s28, 1
      %s30 = scalar_select %p27, %s28, %s29
      %p33 = pneg %p27
      %p34 = scmp.eq.s32.totalorder %s18, 1
      %p35 = por %p33, %p34
      %p36 = scmp.ne.s32.totalorder %s28, %s31
      %p37 = scmp.eq.s32.totalorder %s18, 0
      %p38 = por %p36, %p37
      %p39 = scmp.ne.s32.totalorder %s28, %s31
      %p40 = scmp.eq.s32.totalorder %s23, 1
      %p41 = por %p39, %p40
      %p42 = scmp.ne.s32.totalorder %s31, %s32
      %p43 = scmp.eq.s32.totalorder %s23, 0
      %p44 = por %p42, %p43
      %p45 = scmp.ne.s32.totalorder %s31, %s32
      %p46 = scmp.eq.s32.totalorder %s24, 1
      %p47 = por %p45, %p46
      %p49 = scmp.ne.s32.totalorder %s32, %s48
      %p50 = scmp.eq.s32.totalorder %s24, 0
      %p51 = por %p49, %p50
      %s53 = sadd.s32 %s52, 1
      %p56 = scmp.eq.s32.totalorder %s18, 1
      %p57 = scmp.ne.s32.totalorder %s52, %s54
      %p58 = scmp.eq.s32.totalorder %s18, 0
      %p59 = por %p57, %p58
      %p60 = scmp.ne.s32.totalorder %s52, %s54
      %p61 = scmp.eq.s32.totalorder %s23, 1
      %p62 = por %p60, %p61
      %p63 = scmp.ne.s32.totalorder %s54, %s55
      %p64 = scmp.eq.s32.totalorder %s23, 0
      %p65 = por %p63, %p64
      %p66 = scmp.ne.s32.totalorder %s54, %s55
      %p67 = scmp.eq.s32.totalorder %s24, 1
      %p68 = por %p66, %p67
      %p70 = scmp.ne.s32.totalorder %s55, %s69
      %p71 = scmp.eq.s32.totalorder %s24, 0
      %p72 = por %p70, %p71
      %s74 = sadd.s32 %s73, 1
      %p77 = scmp.eq.s32.totalorder %s18, 1
      %p78 = scmp.ne.s32.totalorder %s73, %s75
      %p79 = scmp.eq.s32.totalorder %s18, 0
      %p80 = por %p78, %p79
      %p81 = scmp.ne.s32.totalorder %s73, %s75
      %p82 = scmp.eq.s32.totalorder %s23, 1
      %p83 = por %p81, %p82
      %p84 = scmp.ne.s32.totalorder %s75, %s76
      %p85 = scmp.eq.s32.totalorder %s23, 0
      %p86 = por %p84, %p85
      %p87 = scmp.ne.s32.totalorder %s75, %s76
      %p88 = scmp.eq.s32.totalorder %s24, 1
      %p89 = por %p87, %p88
      %p91 = scmp.ne.s32.totalorder %s76, %s90
      %p92 = scmp.eq.s32.totalorder %s24, 0
      %p93 = por %p91, %p92
      %s94 = ssub.s32 %s18, %s25
      %p95 = scmp.eq.s32.totalorder %s94, 0
      %s97 = sadd.s32 %s96, 1
      %s98 = scalar_select %p95, %s96, %s97
      %p101 = pneg %p95
      %p102 = scmp.eq.s32.totalorder %s18, 1
      %p103 = por %p101, %p102
      %p104 = scmp.ne.s32.totalorder %s96, %s99
      %p105 = scmp.eq.s32.totalorder %s18, 0
      %p106 = por %p104, %p105
      %p107 = scmp.ne.s32.totalorder %s96, %s99
      %p108 = scmp.eq.s32.totalorder %s23, 1
      %p109 = por %p107, %p108
      %p110 = scmp.ne.s32.totalorder %s99, %s100
      %p111 = scmp.eq.s32.totalorder %s23, 0
      %p112 = por %p110, %p111
      %p113 = scmp.ne.s32.totalorder %s99, %s100
      %p114 = scmp.eq.s32.totalorder %s24, 1
      %p115 = por %p113, %p114
      %p117 = scmp.ne.s32.totalorder %s100, %s116
      %p118 = scmp.eq.s32.totalorder %s24, 0
      %p119 = por %p117, %p118
      %s120 = ssub.s32 %s18, %s25
      %p121 = scmp.eq.s32.totalorder %s120, 0
      %s123 = sadd.s32 %s122, 1
      %s124 = scalar_select %p121, %s122, %s123
      %p127 = pneg %p121
      %p128 = scmp.eq.s32.totalorder %s18, 1
      %p129 = por %p127, %p128
      %p130 = scmp.ne.s32.totalorder %s122, %s125
      %p131 = scmp.eq.s32.totalorder %s18, 0
      %p132 = por %p130, %p131
      %p133 = scmp.ne.s32.totalorder %s122, %s125
      %p134 = scmp.eq.s32.totalorder %s23, 1
      %p135 = por %p133, %p134
      %p136 = scmp.ne.s32.totalorder %s125, %s126
      %p137 = scmp.eq.s32.totalorder %s23, 0
      %p138 = por %p136, %p137
      %p139 = scmp.ne.s32.totalorder %s125, %s126
      %p140 = scmp.eq.s32.totalorder %s24, 1
      %p141 = por %p139, %p140
      %p143 = scmp.ne.s32.totalorder %s126, %s142
      %p144 = scmp.eq.s32.totalorder %s24, 0
      %p145 = por %p143, %p144
      %p146 = scmp.le.s32.totalorder 1, %s18
      %p147 = scmp.lt.s32.totalorder %s18, 3
      %p148 = pnand %p146, %p147
      %p149 = pneg %p148
      // Predicated region
      $region9: #{tpu_custom_call.1} parent=5 // pred_check
        _
      $region10: #{tpu_custom_call.1} parent=5 // pred_check_branch
        %151 = sbr.rel (%p148) target = $region12
      $region11: #{tpu_custom_call.1} parent=5 // pred_region
        %s152 = ssub.s32 %s18, 1
        // Predicated region
        $region13: #{tpu_custom_call.1} parent=11 // pred_check
          %p153 = pneg %p65
        $region14: #{tpu_custom_call.1} parent=11 // pred_check_branch
          %155 = sbr.rel (%p153) target = $region16
        $region15: #{tpu_custom_call.1} parent=11 // pred_region
          _
        $region16: #{tpu_custom_call.1} parent=11 // pred_fallthru
          _
        // Predicated region
        $region17: #{tpu_custom_call.1} parent=11 // pred_check
          %p156 = pneg %p86
        $region18: #{tpu_custom_call.1} parent=11 // pred_check_branch
          %158 = sbr.rel (%p156) target = $region20
        $region19: #{tpu_custom_call.1} parent=11 // pred_region
          %160 = vsyncadd [#allocation3], 0
          %s161 = sshll.u32 %s2, 4
          %s162 = int_to_ptr.hbm [resolvable:$true] %s161
          %s163 = sshll.u32 [#allocation2], 4
          %s164 = int_to_ptr.vmem [resolvable:$true] %s163
          %169 = dma.hbm_to_vmem [thread:$0]  %s162, 1024, %s164, [#allocation3], 64, 64, 4
        $region20: #{tpu_custom_call.1} parent=11 // pred_fallthru
          _
      $region12: #{tpu_custom_call.1} parent=5 // pred_fallthru
        _
      %p170 = scmp.lt.s32.totalorder %s18, 2
      // Predicated region
      $region21: #{tpu_custom_call.1} parent=5 // pred_check
        %p171 = pneg %p170
      $region22: #{tpu_custom_call.1} parent=5 // pred_check_branch
        %173 = sbr.rel (%p171) target = $region24
      $region23: #{tpu_custom_call.1} parent=5 // pred_region
        // Predicated region
        $region25: #{tpu_custom_call.1} parent=23 // pred_check
          %p174 = pneg %p38
        $region26: #{tpu_custom_call.1} parent=23 // pred_check_branch
          %176 = sbr.rel (%p174) target = $region28
        $region27: #{tpu_custom_call.1} parent=23 // pred_region
          %s177 = smul.u32 8, %s18
          %p178 = scmp.lt.s32.totalorder %s177, 15
          %s179 = scalar_select %p178, %s177, 15
          %s180 = smul.addr %s179, 4
          %s181 = scalar_lea.vmem %s0, %s180
          %s182 = smul.u32 8, %s18
        $region28: #{tpu_custom_call.1} parent=23 // pred_fallthru
          _
      $region24: #{tpu_custom_call.1} parent=5 // pred_fallthru
        _
      %p183 = scmp.le.s32.totalorder 1, %s18
      %p184 = scmp.lt.s32.totalorder %s18, 3
      %p185 = pnand %p183, %p184
      %p186 = pneg %p185
      // Predicated region
      $region29: #{tpu_custom_call.1} parent=5 // pred_check
        _
      $region30: #{tpu_custom_call.1} parent=5 // pred_check_branch
        %188 = sbr.rel (%p185) target = $region32
      $region31: #{tpu_custom_call.1} parent=5 // pred_region
        %s189 = ssub.s32 %s18, 1
        // Predicated region
        $region33: #{tpu_custom_call.1} parent=31 // pred_check
          %p190 = pneg %p86
        $region34: #{tpu_custom_call.1} parent=31 // pred_check_branch
          %192 = sbr.rel (%p190) target = $region36
        $region35: #{tpu_custom_call.1} parent=31 // pred_region
          %194 = dma.done [#allocation3], 1024
        $region36: #{tpu_custom_call.1} parent=31 // pred_fallthru
          _
        %s195 = smul.u32 8, %s23
        %p196 = scmp.lt.s32.totalorder %s195, 15
        %s197 = scalar_select %p196, %s195, 15
        %s198 = smul.addr %s197, 4
        %s199 = scalar_lea.vmem %s0, %s198
        %p200 = pneg %p44
        %p201 = pneg %p41
        %p202 = pneg %p65
        %p203 = pneg %p62
        %p204 = pneg %p86
        %p205 = pneg %p83
        %p206 = pneg %p112
        %p207 = pneg %p109
        %s208 = sand.u32 %s99, 1
        %s209 = scalar_lea.sflag [#allocation4], %s208
        %s210 = sand.u32 %s99, 1
        %s211 = smul.addr %s210, 64
        %s212 = scalar_lea.vmem [#allocation5], %s211
        %p213 = pneg %p138
        %p214 = pneg %p135
        %s215 = sand.u32 %s125, 1
        %s216 = scalar_lea.sflag [#allocation7], %s215
        %s217 = sand.u32 %s125, 1
        %s218 = smul.addr %s217, 2
        %s219 = scalar_lea.vmem [#allocation6], %s218
        %s220 = smul.u32 8, %s23
        %p221 = scmp.lt.s32.totalorder %s220, 15
        %s222 = scalar_select %p221, %s220, 15
        %s223 = smul.addr %s222, 4
        %s224 = scalar_lea.vmem %s0, %s223
        %s225 = smul.u32 8, %s23
        %s226 = smul.u32 8, %s23
        %v228 = vld [vmem:[%s224] sm:$0xf]
        %v229 = vld [vmem:[%s224 + $0x4] sm:$0xf]
        %v230 = vld [vmem:[%s224 + $0x8] sm:$0xf]
        %v231 = vld [vmem:[%s224 + $0xc] sm:$0xf]
        %v232 = vld [vmem:[%s224 + $0x10] sm:$0xf]
        %v233 = vld [vmem:[%s224 + $0x14] sm:$0xf]
        %v234 = vld [vmem:[%s224 + $0x18] sm:$0xf]
        %v235 = vld [vmem:[%s224 + $0x1c] sm:$0xf]
        %v236 = vld [vmem:[%s1] sm:$0xff]
        %v237 = vld [vmem:[%s1 + $0x8] sm:$0xff]
        %v238 = vld [vmem:[%s1 + $0x10] sm:$0xff]
        %v239 = vld [vmem:[%s1 + $0x18] sm:$0xff]
        %v240 = vld [vmem:[%s1 + $0x20] sm:$0xff]
        %v241 = vld [vmem:[%s1 + $0x28] sm:$0xff]
        %v242 = vld [vmem:[%s1 + $0x30] sm:$0xff]
        %v243 = vld [vmem:[%s1 + $0x38] sm:$0xff]
        %v252 = vunpack.c.l.b16 %v228
        %v253 = vunpack.c.l.b16 %v229
        %v254 = vunpack.c.l.b16 %v230
        %v255 = vunpack.c.l.b16 %v231
        %v256 = vunpack.c.l.b16 %v232
        %v257 = vunpack.c.l.b16 %v233
        %v258 = vunpack.c.l.b16 %v234
        %v259 = vunpack.c.l.b16 %v235
        %v260 = vpack.c.b16 %v253, %v252
        %v261 = vpack.c.b16 %v255, %v254
        %v262 = vpack.c.b16 %v257, %v256
        %v263 = vpack.c.b16 %v259, %v258
        %v272 = vunpack.c.l.b16 %v236
        %v273 = vunpack.c.h.b16 %v236
        %v274 = vunpack.c.l.b16 %v237
        %v275 = vunpack.c.h.b16 %v237
        %v276 = vunpack.c.l.b16 %v238
        %v277 = vunpack.c.h.b16 %v238
        %v278 = vunpack.c.l.b16 %v239
        %v279 = vunpack.c.h.b16 %v239
        %v280 = vunpack.c.l.b16 %v240
        %v281 = vunpack.c.h.b16 %v240
        %v282 = vunpack.c.l.b16 %v241
        %v283 = vunpack.c.h.b16 %v241
        %v284 = vunpack.c.l.b16 %v242
        %v285 = vunpack.c.h.b16 %v242
        %v286 = vunpack.c.l.b16 %v243
        %v287 = vunpack.c.h.b16 %v243
        %v288 = vpack.c.b16 %v276, %v272
        %v289 = vpack.c.b16 %v277, %v273
        %v290 = vpack.c.b16 %v278, %v274
        %v291 = vpack.c.b16 %v279, %v275
        %v292 = vpack.c.b16 %v284, %v280
        %v293 = vpack.c.b16 %v285, %v281
        %v294 = vpack.c.b16 %v286, %v282
        %v295 = vpack.c.b16 %v287, %v283
        %vm304 = vcmask 261120
        %v306 = vsel %vm304, %v260, 0
        %v309 = vsel %vm304, %v261, 0
        %v312 = vsel %vm304, %v262, 0
        %v315 = vsel %vm304, %v263, 0
        %317 = vmatpush.bf16.msra.mxu0 0
        %318 = vmatpush.bf16.msra.mxu0 0
        %319 = vmatpush.bf16.msra.mxu0 0
        %320 = vmatpush.bf16.msra.mxu0 0
        %321 = vmatpush.bf16.msra.mxu0 0
        %322 = vmatpush.bf16.msra.mxu0 0
        %323 = vmatpush.bf16.msra.mxu0 %v292
        %324 = vmatpush.bf16.msra.mxu0 %v288
        %325 = vmatmul.bf16.gmra.mxu0 %v306
        %v326 = vpop.f32.mrf.mxu0
        %v327 = vadd.f32 0.0, %v326
        %v328 = vpop.f32.mrf.mxu0
        %v329 = vadd.f32 0.0, %v328
        %330 = vmatmul.bf16.gmra.mxu0 %v309
        %v331 = vpop.f32.mrf.mxu0
        %v332 = vadd.f32 0.0, %v331
        %v333 = vpop.f32.mrf.mxu0
        %v334 = vadd.f32 0.0, %v333
        %335 = vmatmul.bf16.gmra.mxu0 %v312
        %v336 = vpop.f32.mrf.mxu0
        %v337 = vadd.f32 0.0, %v336
        %v338 = vpop.f32.mrf.mxu0
        %v339 = vadd.f32 0.0, %v338
        %340 = vmatmul.bf16.gmra.mxu0 %v315
        %v341 = vpop.f32.mrf.mxu0
        %v342 = vadd.f32 0.0, %v341
        %v343 = vpop.f32.mrf.mxu0
        %v344 = vadd.f32 0.0, %v343
        %345 = vdwg.mxu0
        %346 = vmatpush.bf16.msra.mxu0 0
        %347 = vmatpush.bf16.msra.mxu0 0
        %348 = vmatpush.bf16.msra.mxu0 0
        %349 = vmatpush.bf16.msra.mxu0 0
        %350 = vmatpush.bf16.msra.mxu0 0
        %351 = vmatpush.bf16.msra.mxu0 0
        %352 = vmatpush.bf16.msra.mxu0 %v293
        %353 = vmatpush.bf16.msra.mxu0 %v289
        %354 = vmatmul.bf16.gmra.mxu0 %v306
        %v355 = vpop.f32.mrf.mxu0
        %v356 = vadd.f32 0.0, %v355
        %v357 = vpop.f32.mrf.mxu0
        %v358 = vadd.f32 0.0, %v357
        %359 = vmatmul.bf16.gmra.mxu0 %v309
        %v360 = vpop.f32.mrf.mxu0
        %v361 = vadd.f32 0.0, %v360
        %v362 = vpop.f32.mrf.mxu0
        %v363 = vadd.f32 0.0, %v362
        %364 = vmatmul.bf16.gmra.mxu0 %v312
        %v365 = vpop.f32.mrf.mxu0
        %v366 = vadd.f32 0.0, %v365
        %v367 = vpop.f32.mrf.mxu0
        %v368 = vadd.f32 0.0, %v367
        %369 = vmatmul.bf16.gmra.mxu0 %v315
        %v370 = vpop.f32.mrf.mxu0
        %v371 = vadd.f32 0.0, %v370
        %v372 = vpop.f32.mrf.mxu0
        %v373 = vadd.f32 0.0, %v372
        %374 = vdwg.mxu0
        %375 = vmatpush.bf16.msra.mxu0 0
        %376 = vmatpush.bf16.msra.mxu0 0
        %377 = vmatpush.bf16.msra.mxu0 0
        %378 = vmatpush.bf16.msra.mxu0 0
        %379 = vmatpush.bf16.msra.mxu0 0
        %380 = vmatpush.bf16.msra.mxu0 0
        %381 = vmatpush.bf16.msra.mxu0 %v294
        %382 = vmatpush.bf16.msra.mxu0 %v290
        %383 = vmatmul.bf16.gmra.mxu0 %v306
        %v384 = vpop.f32.mrf.mxu0
        %v385 = vadd.f32 0.0, %v384
        %v386 = vpop.f32.mrf.mxu0
        %v387 = vadd.f32 0.0, %v386
        %388 = vmatmul.bf16.gmra.mxu0 %v309
        %v389 = vpop.f32.mrf.mxu0
        %v390 = vadd.f32 0.0, %v389
        %v391 = vpop.f32.mrf.mxu0
        %v392 = vadd.f32 0.0, %v391
        %393 = vmatmul.bf16.gmra.mxu0 %v312
        %v394 = vpop.f32.mrf.mxu0
        %v395 = vadd.f32 0.0, %v394
        %v396 = vpop.f32.mrf.mxu0
        %v397 = vadd.f32 0.0, %v396
        %398 = vmatmul.bf16.gmra.mxu0 %v315
        %v399 = vpop.f32.mrf.mxu0
        %v400 = vadd.f32 0.0, %v399
        %v401 = vpop.f32.mrf.mxu0
        %v402 = vadd.f32 0.0, %v401
        %403 = vdwg.mxu0
        %404 = vmatpush.bf16.msra.mxu0 0
        %405 = vmatpush.bf16.msra.mxu0 0
        %406 = vmatpush.bf16.msra.mxu0 0
        %407 = vmatpush.bf16.msra.mxu0 0
        %408 = vmatpush.bf16.msra.mxu0 0
        %409 = vmatpush.bf16.msra.mxu0 0
        %410 = vmatpush.bf16.msra.mxu0 %v295
        %411 = vmatpush.bf16.msra.mxu0 %v291
        %412 = vmatmul.bf16.gmra.mxu0 %v306
        %v413 = vpop.f32.mrf.mxu0
        %v414 = vadd.f32 0.0, %v413
        %v415 = vpop.f32.mrf.mxu0
        %v416 = vadd.f32 0.0, %v415
        %417 = vmatmul.bf16.gmra.mxu0 %v309
        %v418 = vpop.f32.mrf.mxu0
        %v419 = vadd.f32 0.0, %v418
        %v420 = vpop.f32.mrf.mxu0
        %v421 = vadd.f32 0.0, %v420
        %422 = vmatmul.bf16.gmra.mxu0 %v312
        %v423 = vpop.f32.mrf.mxu0
        %v424 = vadd.f32 0.0, %v423
        %v425 = vpop.f32.mrf.mxu0
        %v426 = vadd.f32 0.0, %v425
        %427 = vmatmul.bf16.gmra.mxu0 %v315
        %v428 = vpop.f32.mrf.mxu0
        %v429 = vadd.f32 0.0, %v428
        %v430 = vpop.f32.mrf.mxu0
        %v431 = vadd.f32 0.0, %v430
        %432 = vdwg.mxu0
        %v433 = vlaneseq
        %v434 = vand.u32 %v433, 127
        %vm435 = vcmp.lt.s32.totalorder %v434, 3
        %v436 = vsel %vm435, %v414, -1e+30
        %v437 = vsel %vm435, %v416, -1e+30
        %v438 = vsel %vm435, %v419, -1e+30
        %v439 = vsel %vm435, %v421, -1e+30
        %v440 = vsel %vm435, %v424, -1e+30
        %v441 = vsel %vm435, %v426, -1e+30
        %v442 = vsel %vm435, %v429, -1e+30
        %v443 = vsel %vm435, %v431, -1e+30
        %444 = vmax.xlane.f32.xlu0 %v436
        %v445 = vpop.xlane.xlu0 %444
        %446 = vmax.xlane.f32.xlu0 %v437
        %v447 = vpop.xlane.xlu0 %446
        %448 = vmax.xlane.f32.xlu0 %v438
        %v449 = vpop.xlane.xlu0 %448
        %450 = vmax.xlane.f32.xlu0 %v439
        %v451 = vpop.xlane.xlu0 %450
        %452 = vmax.xlane.f32.xlu0 %v440
        %v453 = vpop.xlane.xlu0 %452
        %454 = vmax.xlane.f32.xlu0 %v441
        %v455 = vpop.xlane.xlu0 %454
        %456 = vmax.xlane.f32.xlu0 %v442
        %v457 = vpop.xlane.xlu0 %456
        %458 = vmax.xlane.f32.xlu0 %v443
        %v459 = vpop.xlane.xlu0 %458
        %v460 = vsub.f32 %v436, %v445
        %v461 = vsub.f32 %v437, %v447
        %v462 = vsub.f32 %v438, %v449
        %v463 = vsub.f32 %v439, %v451
        %v464 = vsub.f32 %v440, %v453
        %v465 = vsub.f32 %v441, %v455
        %v466 = vsub.f32 %v442, %v457
        %v467 = vsub.f32 %v443, %v459
        %v468 = vmul.f32 %v460, 1.442695
        %v469 = vpow.pop %v468
        %v470 = vmul.f32 %v461, 1.442695
        %v471 = vpow.pop %v470
        %v472 = vmul.f32 %v462, 1.442695
        %v473 = vpow.pop %v472
        %v474 = vmul.f32 %v463, 1.442695
        %v475 = vpow.pop %v474
        %v476 = vmul.f32 %v464, 1.442695
        %v477 = vpow.pop %v476
        %v478 = vmul.f32 %v465, 1.442695
        %v479 = vpow.pop %v478
        %v480 = vmul.f32 %v466, 1.442695
        %v481 = vpow.pop %v480
        %v482 = vmul.f32 %v467, 1.442695
        %v483 = vpow.pop %v482
        %v484 = vsel %vm435, %v469, 0.0
        %v485 = vsel %vm435, %v471, 0.0
        %v486 = vsel %vm435, %v473, 0.0
        %v487 = vsel %vm435, %v475, 0.0
        %v488 = vsel %vm435, %v477, 0.0
        %v489 = vsel %vm435, %v479, 0.0
        %v490 = vsel %vm435, %v481, 0.0
        %v491 = vsel %vm435, %v483, 0.0
        %492 = vadd.xlane.f32.xlu0 %v484
        %v493 = vpop.xlane.xlu0 %492
        %494 = vadd.xlane.f32.xlu0 %v485
        %v495 = vpop.xlane.xlu0 %494
        %496 = vadd.xlane.f32.xlu0 %v486
        %v497 = vpop.xlane.xlu0 %496
        %498 = vadd.xlane.f32.xlu0 %v487
        %v499 = vpop.xlane.xlu0 %498
        %500 = vadd.xlane.f32.xlu0 %v488
        %v501 = vpop.xlane.xlu0 %500
        %502 = vadd.xlane.f32.xlu0 %v489
        %v503 = vpop.xlane.xlu0 %502
        %504 = vadd.xlane.f32.xlu0 %v490
        %v505 = vpop.xlane.xlu0 %504
        %506 = vadd.xlane.f32.xlu0 %v491
        %v507 = vpop.xlane.xlu0 %506
        %v508 = vrcp.pop %v493
        %v509 = vmul.f32 %v493, %v508
        %v510 = vsub.f32 1.0, %v509
        %v511 = vmul.f32 %v508, %v510
        %v512 = vadd.f32 %v508, %v511
        %vm513 = vweird.f32 %v493
        %vm514 = vweird.f32 %v508
        %vm515 = vmor %vm513, %vm514
        %v516 = vsel %vm515, %v508, %v512
        %v517 = vand.u32 2147483647, %v493
        %vm518 = vcmp.eq.f32.partialorder %v517, 8.507059e+37
        %v519 = vand.u32 %v493, 2147483648
        %v520 = vor.u32 1.1754944e-38, %v519
        %v521 = vsel %vm518, %v520, %v516
        %v522 = vrcp.pop %v495
        %v523 = vmul.f32 %v495, %v522
        %v524 = vsub.f32 1.0, %v523
        %v525 = vmul.f32 %v522, %v524
        %v526 = vadd.f32 %v522, %v525
        %vm527 = vweird.f32 %v495
        %vm528 = vweird.f32 %v522
        %vm529 = vmor %vm527, %vm528
        %v530 = vsel %vm529, %v522, %v526
        %v531 = vand.u32 2147483647, %v495
        %vm532 = vcmp.eq.f32.partialorder %v531, 8.507059e+37
        %v533 = vand.u32 %v495, 2147483648
        %v534 = vor.u32 1.1754944e-38, %v533
        %v535 = vsel %vm532, %v534, %v530
        %v536 = vrcp.pop %v497
        %v537 = vmul.f32 %v497, %v536
        %v538 = vsub.f32 1.0, %v537
        %v539 = vmul.f32 %v536, %v538
        %v540 = vadd.f32 %v536, %v539
        %vm541 = vweird.f32 %v497
        %vm542 = vweird.f32 %v536
        %vm543 = vmor %vm541, %vm542
        %v544 = vsel %vm543, %v536, %v540
        %v545 = vand.u32 2147483647, %v497
        %vm546 = vcmp.eq.f32.partialorder %v545, 8.507059e+37
        %v547 = vand.u32 %v497, 2147483648
        %v548 = vor.u32 1.1754944e-38, %v547
        %v549 = vsel %vm546, %v548, %v544
        %v550 = vrcp.pop %v499
        %v551 = vmul.f32 %v499, %v550
        %v552 = vsub.f32 1.0, %v551
        %v553 = vmul.f32 %v550, %v552
        %v554 = vadd.f32 %v550, %v553
        %vm555 = vweird.f32 %v499
        %vm556 = vweird.f32 %v550
        %vm557 = vmor %vm555, %vm556
        %v558 = vsel %vm557, %v550, %v554
        %v559 = vand.u32 2147483647, %v499
        %vm560 = vcmp.eq.f32.partialorder %v559, 8.507059e+37
        %v561 = vand.u32 %v499, 2147483648
        %v562 = vor.u32 1.1754944e-38, %v561
        %v563 = vsel %vm560, %v562, %v558
        %v564 = vrcp.pop %v501
        %v565 = vmul.f32 %v501, %v564
        %v566 = vsub.f32 1.0, %v565
        %v567 = vmul.f32 %v564, %v566
        %v568 = vadd.f32 %v564, %v567
        %vm569 = vweird.f32 %v501
        %vm570 = vweird.f32 %v564
        %vm571 = vmor %vm569, %vm570
        %v572 = vsel %vm571, %v564, %v568
        %v573 = vand.u32 2147483647, %v501
        %vm574 = vcmp.eq.f32.partialorder %v573, 8.507059e+37
        %v575 = vand.u32 %v501, 2147483648
        %v576 = vor.u32 1.1754944e-38, %v575
        %v577 = vsel %vm574, %v576, %v572
        %v578 = vrcp.pop %v503
        %v579 = vmul.f32 %v503, %v578
        %v580 = vsub.f32 1.0, %v579
        %v581 = vmul.f32 %v578, %v580
        %v582 = vadd.f32 %v578, %v581
        %vm583 = vweird.f32 %v503
        %vm584 = vweird.f32 %v578
        %vm585 = vmor %vm583, %vm584
        %v586 = vsel %vm585, %v578, %v582
        %v587 = vand.u32 2147483647, %v503
        %vm588 = vcmp.eq.f32.partialorder %v587, 8.507059e+37
        %v589 = vand.u32 %v503, 2147483648
        %v590 = vor.u32 1.1754944e-38, %v589
        %v591 = vsel %vm588, %v590, %v586
        %v592 = vrcp.pop %v505
        %v593 = vmul.f32 %v505, %v592
        %v594 = vsub.f32 1.0, %v593
        %v595 = vmul.f32 %v592, %v594
        %v596 = vadd.f32 %v592, %v595
        %vm597 = vweird.f32 %v505
        %vm598 = vweird.f32 %v592
        %vm599 = vmor %vm597, %vm598
        %v600 = vsel %vm599, %v592, %v596
        %v601 = vand.u32 2147483647, %v505
        %vm602 = vcmp.eq.f32.partialorder %v601, 8.507059e+37
        %v603 = vand.u32 %v505, 2147483648
        %v604 = vor.u32 1.1754944e-38, %v603
        %v605 = vsel %vm602, %v604, %v600
        %v606 = vrcp.pop %v507
        %v607 = vmul.f32 %v507, %v606
        %v608 = vsub.f32 1.0, %v607
        %v609 = vmul.f32 %v606, %v608
        %v610 = vadd.f32 %v606, %v609
        %vm611 = vweird.f32 %v507
        %vm612 = vweird.f32 %v606
        %vm613 = vmor %vm611, %vm612
        %v614 = vsel %vm613, %v606, %v610
        %v615 = vand.u32 2147483647, %v507
        %vm616 = vcmp.eq.f32.partialorder %v615, 8.507059e+37
        %v617 = vand.u32 %v507, 2147483648
        %v618 = vor.u32 1.1754944e-38, %v617
        %v619 = vsel %vm616, %v618, %v614
        %v620 = vmul.f32 %v484, %v521
        %v621 = vmul.f32 %v485, %v535
        %v622 = vmul.f32 %v486, %v549
        %v623 = vmul.f32 %v487, %v563
        %v624 = vmul.f32 %v488, %v577
        %v625 = vmul.f32 %v489, %v591
        %v626 = vmul.f32 %v490, %v605
        %v627 = vmul.f32 %v491, %v619
        %v628 = vcvt.s32.f32 %v434
        %vm629 = vcmp.eq.f32.partialorder %v436, %v445
        %vm630 = vcmp.eq.f32.partialorder %v437, %v447
        %vm631 = vcmp.eq.f32.partialorder %v438, %v449
        %vm632 = vcmp.eq.f32.partialorder %v439, %v451
        %vm633 = vcmp.eq.f32.partialorder %v440, %v453
        %vm634 = vcmp.eq.f32.partialorder %v441, %v455
        %vm635 = vcmp.eq.f32.partialorder %v442, %v457
        %vm636 = vcmp.eq.f32.partialorder %v443, %v459
        %v637 = vsel %vm629, %v628, 128.0
        %v638 = vsel %vm630, %v628, 128.0
        %v639 = vsel %vm631, %v628, 128.0
        %v640 = vsel %vm632, %v628, 128.0
        %v641 = vsel %vm633, %v628, 128.0
        %v642 = vsel %vm634, %v628, 128.0
        %v643 = vsel %vm635, %v628, 128.0
        %v644 = vsel %vm636, %v628, 128.0
        %645 = vmin.xlane.f32.xlu0 %v637
        %v646 = vpop.xlane.xlu0 %645
        %647 = vmin.xlane.f32.xlu0 %v638
        %v648 = vpop.xlane.xlu0 %647
        %649 = vmin.xlane.f32.xlu0 %v639
        %v650 = vpop.xlane.xlu0 %649
        %651 = vmin.xlane.f32.xlu0 %v640
        %v652 = vpop.xlane.xlu0 %651
        %653 = vmin.xlane.f32.xlu0 %v641
        %v654 = vpop.xlane.xlu0 %653
        %655 = vmin.xlane.f32.xlu0 %v642
        %v656 = vpop.xlane.xlu0 %655
        %657 = vmin.xlane.f32.xlu0 %v643
        %v658 = vpop.xlane.xlu0 %657
        %659 = vmin.xlane.f32.xlu0 %v644
        %v660 = vpop.xlane.xlu0 %659
        %vm661 = vcmp.eq.f32.partialorder %v628, %v646
        %vm662 = vcmp.eq.f32.partialorder %v628, %v648
        %vm663 = vcmp.eq.f32.partialorder %v628, %v650
        %vm664 = vcmp.eq.f32.partialorder %v628, %v652
        %vm665 = vcmp.eq.f32.partialorder %v628, %v654
        %vm666 = vcmp.eq.f32.partialorder %v628, %v656
        %vm667 = vcmp.eq.f32.partialorder %v628, %v658
        %vm668 = vcmp.eq.f32.partialorder %v628, %v660
        %v669 = vsel %vm661, 1, 0
        %v670 = vsel %vm662, 1, 0
        %v671 = vsel %vm663, 1, 0
        %v672 = vsel %vm664, 1, 0
        %v673 = vsel %vm665, 1, 0
        %v674 = vsel %vm666, 1, 0
        %v675 = vsel %vm667, 1, 0
        %v676 = vsel %vm668, 1, 0
        %v677 = vcvt.s32.f32 %v669
        %v678 = vcvt.s32.f32 %v670
        %v679 = vcvt.s32.f32 %v671
        %v680 = vcvt.s32.f32 %v672
        %v681 = vcvt.s32.f32 %v673
        %v682 = vcvt.s32.f32 %v674
        %v683 = vcvt.s32.f32 %v675
        %v684 = vcvt.s32.f32 %v676
        %v685 = vmul.f32 %v677, %v521
        %v686 = vmul.f32 %v678, %v535
        %v687 = vmul.f32 %v679, %v549
        %v688 = vmul.f32 %v680, %v563
        %v689 = vmul.f32 %v681, %v577
        %v690 = vmul.f32 %v682, %v591
        %v691 = vmul.f32 %v683, %v605
        %v692 = vmul.f32 %v684, %v619
        %v693 = vpack.c.bf16 %v686, %v685
        %v694 = vpack.c.bf16 %v688, %v687
        %v695 = vpack.c.bf16 %v690, %v689
        %v696 = vpack.c.bf16 %v692, %v691
        %v697 = vld [vmem:[#allocation2] sm:$0xf]
        %v698 = vld [vmem:[#allocation2 + $0x4] sm:$0xf]
        %v699 = vld [vmem:[#allocation2 + $0x8] sm:$0xf]
        %v700 = vld [vmem:[#allocation2 + $0xc] sm:$0xf]
        %v701 = vld [vmem:[#allocation2 + $0x10] sm:$0xf]
        %v702 = vld [vmem:[#allocation2 + $0x14] sm:$0xf]
        %v703 = vld [vmem:[#allocation2 + $0x18] sm:$0xf]
        %v704 = vld [vmem:[#allocation2 + $0x1c] sm:$0xf]
        %v705 = vld [vmem:[#allocation2 + $0x20] sm:$0xf]
        %v706 = vld [vmem:[#allocation2 + $0x24] sm:$0xf]
        %v707 = vld [vmem:[#allocation2 + $0x28] sm:$0xf]
        %v708 = vld [vmem:[#allocation2 + $0x2c] sm:$0xf]
        %v709 = vld [vmem:[#allocation2 + $0x30] sm:$0xf]
        %v710 = vld [vmem:[#allocation2 + $0x34] sm:$0xf]
        %v711 = vld [vmem:[#allocation2 + $0x38] sm:$0xf]
        %v712 = vld [vmem:[#allocation2 + $0x3c] sm:$0xf]
        %714 = vset.pattern.permute.xlu0 0
        %715 = vperm.xlu0 %714, %v685
        %v716 = vpop.permute.xlu0 %715
        %719 = vset.pattern.permute.xlu0 0
        %720 = vperm.xlu0 %719, %v686
        %v721 = vpop.permute.xlu0 %720
        %724 = vset.pattern.permute.xlu0 0
        %725 = vperm.xlu0 %724, %v687
        %v726 = vpop.permute.xlu0 %725
        %729 = vset.pattern.permute.xlu0 0
        %730 = vperm.xlu0 %729, %v688
        %v731 = vpop.permute.xlu0 %730
        %734 = vset.pattern.permute.xlu0 0
        %735 = vperm.xlu0 %734, %v689
        %v736 = vpop.permute.xlu0 %735
        %739 = vset.pattern.permute.xlu0 0
        %740 = vperm.xlu0 %739, %v690
        %v741 = vpop.permute.xlu0 %740
        %744 = vset.pattern.permute.xlu0 0
        %745 = vperm.xlu0 %744, %v691
        %v746 = vpop.permute.xlu0 %745
        %749 = vset.pattern.permute.xlu0 0
        %750 = vperm.xlu0 %749, %v692
        %v751 = vpop.permute.xlu0 %750
        %v753 = vmul.f32 %v716, %v327
        %v754 = vmul.f32 %v721, %v329
        %v755 = vmul.f32 %v726, %v332
        %v756 = vmul.f32 %v731, %v334
        %v757 = vmul.f32 %v736, %v337
        %v758 = vmul.f32 %v741, %v339
        %v759 = vmul.f32 %v746, %v342
        %v760 = vmul.f32 %v751, %v344
        %v777 = vunpack.c.l.b16 %v697
        %v778 = vunpack.c.l.b16 %v698
        %v779 = vunpack.c.l.b16 %v699
        %v780 = vunpack.c.l.b16 %v700
        %v781 = vunpack.c.l.b16 %v701
        %v782 = vunpack.c.l.b16 %v702
        %v783 = vunpack.c.l.b16 %v703
        %v784 = vunpack.c.l.b16 %v704
        %v785 = vunpack.c.l.b16 %v705
        %v786 = vunpack.c.l.b16 %v706
        %v787 = vunpack.c.l.b16 %v707
        %v788 = vunpack.c.l.b16 %v708
        %v789 = vunpack.c.l.b16 %v709
        %v790 = vunpack.c.l.b16 %v710
        %v791 = vunpack.c.l.b16 %v711
        %v792 = vunpack.c.l.b16 %v712
        %v793 = vpack.c.b16 %v778, %v777
        %v794 = vpack.c.b16 %v780, %v779
        %v795 = vpack.c.b16 %v782, %v781
        %v796 = vpack.c.b16 %v784, %v783
        %v797 = vpack.c.b16 %v786, %v785
        %v798 = vpack.c.b16 %v788, %v787
        %v799 = vpack.c.b16 %v790, %v789
        %v800 = vpack.c.b16 %v792, %v791
        %809 = vmatpush.bf16.msra.mxu0 %v800
        %810 = vmatpush.bf16.msra.mxu0 %v799
        %811 = vmatpush.bf16.msra.mxu0 %v798
        %812 = vmatpush.bf16.msra.mxu0 %v797
        %813 = vmatpush.bf16.msra.mxu0 %v796
        %814 = vmatpush.bf16.msra.mxu0 %v795
        %815 = vmatpush.bf16.msra.mxu0 %v794
        %816 = vmatpush.bf16.msra.mxu0 %v793
        %817 = vmatmul.bf16.gmra.mxu0 %v693
        %v818 = vpop.f32.mrf.mxu0
        %v819 = vadd.f32 %v753, %v818
        %v820 = vpop.f32.mrf.mxu0
        %v821 = vadd.f32 %v754, %v820
        %822 = vmatmul.bf16.gmra.mxu0 %v694
        %v823 = vpop.f32.mrf.mxu0
        %v824 = vadd.f32 %v755, %v823
        %v825 = vpop.f32.mrf.mxu0
        %v826 = vadd.f32 %v756, %v825
        %827 = vmatmul.bf16.gmra.mxu0 %v695
        %v828 = vpop.f32.mrf.mxu0
        %v829 = vadd.f32 %v757, %v828
        %v830 = vpop.f32.mrf.mxu0
        %v831 = vadd.f32 %v758, %v830
        %832 = vmatmul.bf16.gmra.mxu0 %v696
        %v833 = vpop.f32.mrf.mxu0
        %v834 = vadd.f32 %v759, %v833
        %v835 = vpop.f32.mrf.mxu0
        %v836 = vadd.f32 %v760, %v835
        %837 = vdwg.mxu0
        %838 = vset.pattern.permute.xlu0 1
        %839 = vperm.xlu0 %838, %v685
        %v840 = vpop.permute.xlu0 %839
        %842 = vset.pattern.permute.xlu0 1
        %843 = vperm.xlu0 %842, %v686
        %v844 = vpop.permute.xlu0 %843
        %846 = vset.pattern.permute.xlu0 1
        %847 = vperm.xlu0 %846, %v687
        %v848 = vpop.permute.xlu0 %847
        %850 = vset.pattern.permute.xlu0 1
        %851 = vperm.xlu0 %850, %v688
        %v852 = vpop.permute.xlu0 %851
        %854 = vset.pattern.permute.xlu0 1
        %855 = vperm.xlu0 %854, %v689
        %v856 = vpop.permute.xlu0 %855
        %858 = vset.pattern.permute.xlu0 1
        %859 = vperm.xlu0 %858, %v690
        %v860 = vpop.permute.xlu0 %859
        %862 = vset.pattern.permute.xlu0 1
        %863 = vperm.xlu0 %862, %v691
        %v864 = vpop.permute.xlu0 %863
        %866 = vset.pattern.permute.xlu0 1
        %867 = vperm.xlu0 %866, %v692
        %v868 = vpop.permute.xlu0 %867
        %v870 = vmul.f32 %v840, %v356
        %v871 = vmul.f32 %v844, %v358
        %v872 = vmul.f32 %v848, %v361
        %v873 = vmul.f32 %v852, %v363
        %v874 = vmul.f32 %v856, %v366
        %v875 = vmul.f32 %v860, %v368
        %v876 = vmul.f32 %v864, %v371
        %v877 = vmul.f32 %v868, %v373
        %v878 = vadd.f32 %v819, %v870
        %v879 = vadd.f32 %v821, %v871
        %v880 = vadd.f32 %v824, %v872
        %v881 = vadd.f32 %v826, %v873
        %v882 = vadd.f32 %v829, %v874
        %v883 = vadd.f32 %v831, %v875
        %v884 = vadd.f32 %v834, %v876
        %v885 = vadd.f32 %v836, %v877
        %886 = vset.pattern.permute.xlu0 2
        %887 = vperm.xlu0 %886, %v685
        %v888 = vpop.permute.xlu0 %887
        %890 = vset.pattern.permute.xlu0 2
        %891 = vperm.xlu0 %890, %v686
        %v892 = vpop.permute.xlu0 %891
        %894 = vset.pattern.permute.xlu0 2
        %895 = vperm.xlu0 %894, %v687
        %v896 = vpop.permute.xlu0 %895
        %898 = vset.pattern.permute.xlu0 2
        %899 = vperm.xlu0 %898, %v688
        %v900 = vpop.permute.xlu0 %899
        %902 = vset.pattern.permute.xlu0 2
        %903 = vperm.xlu0 %902, %v689
        %v904 = vpop.permute.xlu0 %903
        %906 = vset.pattern.permute.xlu0 2
        %907 = vperm.xlu0 %906, %v690
        %v908 = vpop.permute.xlu0 %907
        %910 = vset.pattern.permute.xlu0 2
        %911 = vperm.xlu0 %910, %v691
        %v912 = vpop.permute.xlu0 %911
        %914 = vset.pattern.permute.xlu0 2
        %915 = vperm.xlu0 %914, %v692
        %v916 = vpop.permute.xlu0 %915
        %v918 = vmul.f32 %v888, %v385
        %v919 = vmul.f32 %v892, %v387
        %v920 = vmul.f32 %v896, %v390
        %v921 = vmul.f32 %v900, %v392
        %v922 = vmul.f32 %v904, %v395
        %v923 = vmul.f32 %v908, %v397
        %v924 = vmul.f32 %v912, %v400
        %v925 = vmul.f32 %v916, %v402
        %v926 = vadd.f32 %v878, %v918
        %v927 = vadd.f32 %v879, %v919
        %v928 = vadd.f32 %v880, %v920
        %v929 = vadd.f32 %v881, %v921
        %v930 = vadd.f32 %v882, %v922
        %v931 = vadd.f32 %v883, %v923
        %v932 = vadd.f32 %v884, %v924
        %v933 = vadd.f32 %v885, %v925
        %934 = vst [vmem:[%s212] sm:$0xff] %v926
        %935 = vst [vmem:[%s212 + $0x8] sm:$0xff] %v927
        %936 = vst [vmem:[%s212 + $0x10] sm:$0xff] %v928
        %937 = vst [vmem:[%s212 + $0x18] sm:$0xff] %v929
        %938 = vst [vmem:[%s212 + $0x20] sm:$0xff] %v930
        %939 = vst [vmem:[%s212 + $0x28] sm:$0xff] %v931
        %940 = vst [vmem:[%s212 + $0x30] sm:$0xff] %v932
        %941 = vst [vmem:[%s212 + $0x38] sm:$0xff] %v933
        %v942 = vadd.f32 %v620, %v621
        %v943 = vadd.f32 %v942, %v622
        %v944 = vadd.f32 %v943, %v623
        %v945 = vadd.f32 %v944, %v624
        %v946 = vadd.f32 %v945, %v625
        %v947 = vadd.f32 %v946, %v626
        %v948 = vadd.f32 %v947, %v627
        %v949 = vrot.slane %v948, 4
        %v950 = vadd.f32 %v948, %v949
        %v951 = vrot.slane %v950, 2
        %v952 = vadd.f32 %v950, %v951
        %v953 = vrot.slane %v952, 1
        %v954 = vadd.f32 %v952, %v953
        %v955 = vadd.f32 %v677, %v678
        %v956 = vadd.f32 %v955, %v679
        %v957 = vadd.f32 %v956, %v680
        %v958 = vadd.f32 %v957, %v681
        %v959 = vadd.f32 %v958, %v682
        %v960 = vadd.f32 %v959, %v683
        %v961 = vadd.f32 %v960, %v684
        %v962 = vrot.slane %v961, 4
        %v963 = vadd.f32 %v961, %v962
        %v964 = vrot.slane %v963, 2
        %v965 = vadd.f32 %v963, %v964
        %v966 = vrot.slane %v965, 1
        %v967 = vadd.f32 %v965, %v966
        %vm968 = vcmask 1040384
        %v969 = vsel %vm968, %v954, %v967
        %970 = vst [vmem:[%s219] sm:$0x3] %v969
        %s971 = sand.u32 %s99, 1
        %s972 = scalar_lea.sflag [#allocation4], %s971
        %s973 = sand.u32 %s99, 1
        %s974 = smul.addr %s973, 64
        %s975 = scalar_lea.vmem [#allocation5], %s974
        %s976 = sand.u32 %s125, 1
        %s977 = scalar_lea.sflag [#allocation7], %s976
        %s978 = sand.u32 %s125, 1
        %s979 = smul.addr %s978, 2
        %s980 = scalar_lea.vmem [#allocation6], %s979
        // Predicated region
        $region37: #{tpu_custom_call.1} parent=31 // pred_check
          %p981 = pneg %p109
        $region38: #{tpu_custom_call.1} parent=31 // pred_check_branch
          %983 = sbr.rel (%p981) target = $region40
        $region39: #{tpu_custom_call.1} parent=31 // pred_region
          %s984 = smul.u32 8, %s23
          %986 = vsyncadd %s972, 0
          %s987 = smul.addr %s984, 8
          %s988 = scalar_lea.hbm %s3, %s987
          %s989 = sshll.u32 %s975, 4
          %s990 = int_to_ptr.vmem [resolvable:$true] %s989
          %s991 = sshll.u32 %s988, 4
          %s992 = int_to_ptr.hbm [resolvable:$true] %s991
          %997 = dma.vmem_to_hbm [thread:$0]  %s990, 1024, %s992, %s972, 128, 128, 8
        $region40: #{tpu_custom_call.1} parent=31 // pred_fallthru
          _
        // Predicated region
        $region41: #{tpu_custom_call.1} parent=31 // pred_check
          %p998 = pneg %p135
        $region42: #{tpu_custom_call.1} parent=31 // pred_check_branch
          %1000 = sbr.rel (%p998) target = $region44
        $region43: #{tpu_custom_call.1} parent=31 // pred_region
          %1002 = vsyncadd %s977, 0
          %s1003 = smul.addr %s23, 2
          %s1004 = scalar_lea.hbm %s4, %s1003
          %s1006 = sshll.u32 %s980, 4
          %s1007 = int_to_ptr.vmem [resolvable:$true] %s1006
          %s1008 = sshll.u32 %s1004, 4
          %s1009 = int_to_ptr.hbm [resolvable:$true] %s1008
          %1011 = dma.vmem_to_hbm [thread:$0]  %s1007, 32, %s1009, %s977
        $region44: #{tpu_custom_call.1} parent=31 // pred_fallthru
          _
      $region32: #{tpu_custom_call.1} parent=5 // pred_fallthru
        _
      %p1012 = scmp.le.s32.totalorder 2, %s18
      // Predicated region
      $region45: #{tpu_custom_call.1} parent=5 // pred_check
        %p1013 = pneg %p1012
      $region46: #{tpu_custom_call.1} parent=5 // pred_check_branch
        %1015 = sbr.rel (%p1013) target = $region48
      $region47: #{tpu_custom_call.1} parent=5 // pred_region
        %s1016 = ssub.s32 %s18, 2
        // Predicated region
        $region49: #{tpu_custom_call.1} parent=47 // pred_check
          %p1017 = pneg %p115
        $region50: #{tpu_custom_call.1} parent=47 // pred_check_branch
          %1019 = sbr.rel (%p1017) target = $region52
        $region51: #{tpu_custom_call.1} parent=47 // pred_region
          %s1020 = sand.u32 %s100, 1
          %s1021 = scalar_lea.sflag [#allocation4], %s1020
          %s1022 = sand.u32 %s100, 1
          %s1023 = smul.addr %s1022, 64
          %s1024 = scalar_lea.vmem [#allocation5], %s1023
          %1026 = dma.done %s1021, 1024
        $region52: #{tpu_custom_call.1} parent=47 // pred_fallthru
          _
        // Predicated region
        $region53: #{tpu_custom_call.1} parent=47 // pred_check
          %p1027 = pneg %p141
        $region54: #{tpu_custom_call.1} parent=47 // pred_check_branch
          %1029 = sbr.rel (%p1027) target = $region56
        $region55: #{tpu_custom_call.1} parent=47 // pred_region
          %s1030 = sand.u32 %s126, 1
          %s1031 = scalar_lea.sflag [#allocation7], %s1030
          %s1032 = sand.u32 %s126, 1
          %s1033 = smul.addr %s1032, 2
          %s1034 = scalar_lea.vmem [#allocation6], %s1033
          %1036 = dma.done %s1031, 32
        $region56: #{tpu_custom_call.1} parent=47 // pred_fallthru
          _
      $region48: #{tpu_custom_call.1} parent=5 // pred_fallthru
        _
    $region6: #{tpu_custom_call.1} parent=1 // loop_footer
      %s22 = sadd.s32 1, %s18
    $region7: #{tpu_custom_call.1} parent=1 // loop_footer_branch
      %17 = sbr.rel target = $region3
    $region8: #{tpu_custom_call.1} parent=1 // loop_exit
      _
    %1037 = vsyncpa [#allocation3], 1
    %s1038 = scalar_lea.sflag [#allocation3], 1
    %1039 = vsyncpa %s1038, 1
    %1040 = vsyncpa [#allocation4], 1
    %s1041 = scalar_lea.sflag [#allocation4], 1
    %1042 = vsyncpa %s1041, 1
    %1043 = vsyncpa [#allocation7], 1
    %s1044 = scalar_lea.sflag [#allocation7], 1
    %1045 = vsyncpa %s1044, 1

// kernel: tpu_custom_call.1
$region0: #{tpu_custom_call.1}
  #allocation0 [shape = 'u32[]', space=smem, size = 0x4, offset = 0x4, fixed_abs, tag = 'smem constant byte address 0x4 - core index']
  #allocation1 [shape = 'u32[72,128]{1,0:T(1,128)}', space=vmem, size = 0x9000, scoped, tag = 'internal scratch']
  %s0 = inlined_call_operand.vmem [shape: bf16[128,32], index: 0, kind: input, shape index: {}]
  %s1 = inlined_call_operand.vmem [shape: bf16[32,512], index: 1, kind: input, shape index: {}]
  %s2 = inlined_call_operand.hbm [shape: bf16[128,128], index: 2, kind: input, shape index: {}]
  %s3 = inlined_call_operand.hbm [shape: f32[128,128], index: 3, kind: output, shape index: {0}]
  %s4 = inlined_call_operand.hbm [shape: f32[2,2,128], index: 4, kind: output, shape index: {1}]
  %5 = xla_tuple %s3, %s4
  %s6 = sld [smem:[#allocation0]]
  $region57: #{tpu_custom_call.1} parent=0
    _
  %s8 = ssub.s32 1, %s6
  %s9 = scalar_select 0, %s8, %s6
  $region1: #{tpu_custom_call.1} parent=0
    #allocation2 [shape = 'u8[32768]{0}', space=vmem, size = 0x8000, scoped, tag = 'input window, operand 2, single buffered']
    #allocation3 [shape = 's32[2]{0}', space=sflag, size = 0x8, scoped, tag = 'scoped memory for tpu_custom_call.1']
    #allocation4 [shape = 's32[2]{0}', space=sflag, size = 0x8, scoped, tag = 'scoped memory for tpu_custom_call.1']
    #allocation5 [shape = 'u8[65536]{0}', space=vmem, size = 0x10000, scoped, tag = 'output window, operand 0']
    #allocation6 [shape = 'u8[2048]{0}', space=vmem, size = 0x800, scoped, tag = 'output window, operand 1']
    #allocation7 [shape = 's32[2]{0}', space=sflag, size = 0x8, scoped, tag = 'scoped memory for tpu_custom_call.1']
    %10 = vsyncpa [#allocation3], 0
    %11 = vsyncpa [#allocation4], 0
    %s12 = scalar_lea.sflag [#allocation4], 1
    %13 = vsyncpa %s12, 0
    %14 = vsyncpa [#allocation7], 0
    %s15 = scalar_lea.sflag [#allocation7], 1
    %16 = vsyncpa %s15, 0
    loop: start=0, step=1, limit=4
    $region2: #{tpu_custom_call.1} parent=1 // loop_pre_header
      _
    $region3: #{tpu_custom_call.1} parent=1 // loop_header
      %s18 = sphi 0, %s22
      %p19 = scmp.ge.s32.totalorder %s18, 4
      %s28 = sphi 0, %s30
      %s31 = sphi 0, %s28
      %s32 = sphi 0, %s31
      %s48 = sphi 0, %s32
      %s52 = sphi 0, %s52
      %s54 = sphi 0, %s52
      %s55 = sphi 0, %s54
      %s69 = sphi 0, %s55
      %s73 = sphi 0, %s73
      %s75 = sphi 0, %s73
      %s76 = sphi 0, %s75
      %s90 = sphi 0, %s76
      %s96 = sphi 0, %s98
      %s99 = sphi 0, %s96
      %s100 = sphi 0, %s99
      %s116 = sphi 0, %s100
      %s122 = sphi 0, %s124
      %s125 = sphi 0, %s122
      %s126 = sphi 0, %s125
      %s142 = sphi 0, %s126
    $region4: #{tpu_custom_call.1} parent=1 // loop_header_branch
      %21 = sbr.rel (%p19) target = $region8
    $region5: #{tpu_custom_call.1} parent=1 // loop_body
      %s23 = ssub.s32 %s18, 1
      %s24 = ssub.s32 %s18, 2
      %s25 = sadd.s32 %s18, 1
      %s26 = ssub.s32 %s18, %s25
      %p27 = scmp.eq.s32.totalorder %s26, 0
      %s29 = sadd.s32 %s28, 1
      %s30 = scalar_select %p27, %s28, %s29
      %p33 = pneg %p27
      %p34 = scmp.eq.s32.totalorder %s18, 1
      %p35 = por %p33, %p34
      %p36 = scmp.ne.s32.totalorder %s28, %s31
      %p37 = scmp.eq.s32.totalorder %s18, 0
      %p38 = por %p36, %p37
      %p39 = scmp.ne.s32.totalorder %s28, %s31
      %p40 = scmp.eq.s32.totalorder %s23, 1
      %p41 = por %p39, %p40
      %p42 = scmp.ne.s32.totalorder %s31, %s32
      %p43 = scmp.eq.s32.totalorder %s23, 0
      %p44 = por %p42, %p43
      %p45 = scmp.ne.s32.totalorder %s31, %s32
      %p46 = scmp.eq.s32.totalorder %s24, 1
      %p47 = por %p45, %p46
      %p49 = scmp.ne.s32.totalorder %s32, %s48
      %p50 = scmp.eq.s32.totalorder %s24, 0
      %p51 = por %p49, %p50
      %s53 = sadd.s32 %s52, 1
      %p56 = scmp.eq.s32.totalorder %s18, 1
      %p57 = scmp.ne.s32.totalorder %s52, %s54
      %p58 = scmp.eq.s32.totalorder %s18, 0
      %p59 = por %p57, %p58
      %p60 = scmp.ne.s32.totalorder %s52, %s54
      %p61 = scmp.eq.s32.totalorder %s23, 1
      %p62 = por %p60, %p61
      %p63 = scmp.ne.s32.totalorder %s54, %s55
      %p64 = scmp.eq.s32.totalorder %s23, 0
      %p65 = por %p63, %p64
      %p66 = scmp.ne.s32.totalorder %s54, %s55
      %p67 = scmp.eq.s32.totalorder %s24, 1
      %p68 = por %p66, %p67
      %p70 = scmp.ne.s32.totalorder %s55, %s69
      %p71 = scmp.eq.s32.totalorder %s24, 0
      %p72 = por %p70, %p71
      %s74 = sadd.s32 %s73, 1
      %p77 = scmp.eq.s32.totalorder %s18, 1
      %p78 = scmp.ne.s32.totalorder %s73, %s75
      %p79 = scmp.eq.s32.totalorder %s18, 0
      %p80 = por %p78, %p79
      %p81 = scmp.ne.s32.totalorder %s73, %s75
      %p82 = scmp.eq.s32.totalorder %s23, 1
      %p83 = por %p81, %p82
      %p84 = scmp.ne.s32.totalorder %s75, %s76
      %p85 = scmp.eq.s32.totalorder %s23, 0
      %p86 = por %p84, %p85
      %p87 = scmp.ne.s32.totalorder %s75, %s76
      %p88 = scmp.eq.s32.totalorder %s24, 1
      %p89 = por %p87, %p88
      %p91 = scmp.ne.s32.totalorder %s76, %s90
      %p92 = scmp.eq.s32.totalorder %s24, 0
      %p93 = por %p91, %p92
      %s94 = ssub.s32 %s18, %s25
      %p95 = scmp.eq.s32.totalorder %s94, 0
      %s97 = sadd.s32 %s96, 1
      %s98 = scalar_select %p95, %s96, %s97
      %p101 = pneg %p95
      %p102 = scmp.eq.s32.totalorder %s18, 1
      %p103 = por %p101, %p102
      %p104 = scmp.ne.s32.totalorder %s96, %s99
      %p105 = scmp.eq.s32.totalorder %s18, 0
      %p106 = por %p104, %p105
      %p107 = scmp.ne.s32.totalorder %s96, %s99
      %p108 = scmp.eq.s32.totalorder %s23, 1
      %p109 = por %p107, %p108
      %p110 = scmp.ne.s32.totalorder %s99, %s100
      %p111 = scmp.eq.s32.totalorder %s23, 0
      %p112 = por %p110, %p111
      %p113 = scmp.ne.s32.totalorder %s99, %s100
      %p114 = scmp.eq.s32.totalorder %s24, 1
      %p115 = por %p113, %p114
      %p117 = scmp.ne.s32.totalorder %s100, %s116
      %p118 = scmp.eq.s32.totalorder %s24, 0
      %p119 = por %p117, %p118
      %s120 = ssub.s32 %s18, %s25
      %p121 = scmp.eq.s32.totalorder %s120, 0
      %s123 = sadd.s32 %s122, 1
      %s124 = scalar_select %p121, %s122, %s123
      %p127 = pneg %p121
      %p128 = scmp.eq.s32.totalorder %s18, 1
      %p129 = por %p127, %p128
      %p130 = scmp.ne.s32.totalorder %s122, %s125
      %p131 = scmp.eq.s32.totalorder %s18, 0
      %p132 = por %p130, %p131
      %p133 = scmp.ne.s32.totalorder %s122, %s125
      %p134 = scmp.eq.s32.totalorder %s23, 1
      %p135 = por %p133, %p134
      %p136 = scmp.ne.s32.totalorder %s125, %s126
      %p137 = scmp.eq.s32.totalorder %s23, 0
      %p138 = por %p136, %p137
      %p139 = scmp.ne.s32.totalorder %s125, %s126
      %p140 = scmp.eq.s32.totalorder %s24, 1
      %p141 = por %p139, %p140
      %p143 = scmp.ne.s32.totalorder %s126, %s142
      %p144 = scmp.eq.s32.totalorder %s24, 0
      %p145 = por %p143, %p144
      %p146 = scmp.le.s32.totalorder 1, %s18
      %p147 = scmp.lt.s32.totalorder %s18, 3
      %p148 = pnand %p146, %p147
      %p149 = pneg %p148
      // Predicated region
      $region9: #{tpu_custom_call.1} parent=5 // pred_check
        _
      $region10: #{tpu_custom_call.1} parent=5 // pred_check_branch
        %151 = sbr.rel (%p148) target = $region12
      $region11: #{tpu_custom_call.1} parent=5 // pred_region
        %s152 = ssub.s32 %s18, 1
        // Predicated region
        $region13: #{tpu_custom_call.1} parent=11 // pred_check
          %p153 = pneg %p65
        $region14: #{tpu_custom_call.1} parent=11 // pred_check_branch
          %155 = sbr.rel (%p153) target = $region16
        $region15: #{tpu_custom_call.1} parent=11 // pred_region
          _
        $region16: #{tpu_custom_call.1} parent=11 // pred_fallthru
          _
        // Predicated region
        $region17: #{tpu_custom_call.1} parent=11 // pred_check
          %p156 = pneg %p86
        $region18: #{tpu_custom_call.1} parent=11 // pred_check_branch
          %158 = sbr.rel (%p156) target = $region20
        $region19: #{tpu_custom_call.1} parent=11 // pred_region
          %160 = vsyncadd [#allocation3], 0
          %s161 = sshll.u32 %s2, 4
          %s162 = int_to_ptr.hbm [resolvable:$true] %s161
          %s163 = sshll.u32 [#allocation2], 4
          %s164 = int_to_ptr.vmem [resolvable:$true] %s163
          %169 = dma.hbm_to_vmem [thread:$0]  %s162, 1024, %s164, [#allocation3], 64, 64, 4
        $region20: #{tpu_custom_call.1} parent=11 // pred_fallthru
          _
      $region12: #{tpu_custom_call.1} parent=5 // pred_fallthru
        _
      %p170 = scmp.lt.s32.totalorder %s18, 2
      // Predicated region
      $region21: #{tpu_custom_call.1} parent=5 // pred_check
        %p171 = pneg %p170
      $region22: #{tpu_custom_call.1} parent=5 // pred_check_branch
        %173 = sbr.rel (%p171) target = $region24
      $region23: #{tpu_custom_call.1} parent=5 // pred_region
        // Predicated region
        $region25: #{tpu_custom_call.1} parent=23 // pred_check
          %p174 = pneg %p38
        $region26: #{tpu_custom_call.1} parent=23 // pred_check_branch
          %176 = sbr.rel (%p174) target = $region28
        $region27: #{tpu_custom_call.1} parent=23 // pred_region
          %s177 = smul.u32 8, %s18
          %p178 = scmp.lt.s32.totalorder %s177, 15
          %s179 = scalar_select %p178, %s177, 15
          %s180 = smul.addr %s179, 4
          %s181 = scalar_lea.vmem %s0, %s180
          %s182 = smul.u32 8, %s18
        $region28: #{tpu_custom_call.1} parent=23 // pred_fallthru
          _
      $region24: #{tpu_custom_call.1} parent=5 // pred_fallthru
        _
      %p183 = scmp.le.s32.totalorder 1, %s18
      %p184 = scmp.lt.s32.totalorder %s18, 3
      %p185 = pnand %p183, %p184
      %p186 = pneg %p185
      // Predicated region
      $region29: #{tpu_custom_call.1} parent=5 // pred_check
        _
      $region30: #{tpu_custom_call.1} parent=5 // pred_check_branch
        %188 = sbr.rel (%p185) target = $region32
      $region31: #{tpu_custom_call.1} parent=5 // pred_region
        %s189 = ssub.s32 %s18, 1
        // Predicated region
        $region33: #{tpu_custom_call.1} parent=31 // pred_check
          %p190 = pneg %p86
        $region34: #{tpu_custom_call.1} parent=31 // pred_check_branch
          %192 = sbr.rel (%p190) target = $region36
        $region35: #{tpu_custom_call.1} parent=31 // pred_region
          %194 = dma.done [#allocation3], 1024
        $region36: #{tpu_custom_call.1} parent=31 // pred_fallthru
          _
        %s195 = smul.u32 8, %s23
        %p196 = scmp.lt.s32.totalorder %s195, 15
        %s197 = scalar_select %p196, %s195, 15
        %s198 = smul.addr %s197, 4
        %s199 = scalar_lea.vmem %s0, %s198
        %p200 = pneg %p44
        %p201 = pneg %p41
        %p202 = pneg %p65
        %p203 = pneg %p62
        %p204 = pneg %p86
        %p205 = pneg %p83
        %p206 = pneg %p112
        %p207 = pneg %p109
        %s208 = sand.u32 %s99, 1
        %s209 = scalar_lea.sflag [#allocation4], %s208
        %s210 = sand.u32 %s99, 1
        %s211 = smul.addr %s210, 64
        %s212 = scalar_lea.vmem [#allocation5], %s211
        %p213 = pneg %p138
        %p214 = pneg %p135
        %s215 = sand.u32 %s125, 1
        %s216 = scalar_lea.sflag [#allocation7], %s215
        %s217 = sand.u32 %s125, 1
        %s218 = smul.addr %s217, 2
        %s219 = scalar_lea.vmem [#allocation6], %s218
        %s220 = smul.u32 8, %s23
        %p221 = scmp.lt.s32.totalorder %s220, 15
        %s222 = scalar_select %p221, %s220, 15
        %s223 = smul.addr %s222, 4
        %s224 = scalar_lea.vmem %s0, %s223
        %s225 = smul.u32 8, %s23
        %s226 = smul.u32 8, %s23
        %v228 = vld [vmem:[%s224] sm:$0xf]
        %v229 = vld [vmem:[%s224 + $0x4] sm:$0xf]
        %v230 = vld [vmem:[%s224 + $0x8] sm:$0xf]
        %v231 = vld [vmem:[%s224 + $0xc] sm:$0xf]
        %v232 = vld [vmem:[%s224 + $0x10] sm:$0xf]
        %v233 = vld [vmem:[%s224 + $0x14] sm:$0xf]
        %v234 = vld [vmem:[%s224 + $0x18] sm:$0xf]
        %v235 = vld [vmem:[%s224 + $0x1c] sm:$0xf]
        %v236 = vld [vmem:[%s1] sm:$0xff]
        %v237 = vld [vmem:[%s1 + $0x8] sm:$0xff]
        %v238 = vld [vmem:[%s1 + $0x10] sm:$0xff]
        %v239 = vld [vmem:[%s1 + $0x18] sm:$0xff]
        %v240 = vld [vmem:[%s1 + $0x20] sm:$0xff]
        %v241 = vld [vmem:[%s1 + $0x28] sm:$0xff]
        %v242 = vld [vmem:[%s1 + $0x30] sm:$0xff]
        %v243 = vld [vmem:[%s1 + $0x38] sm:$0xff]
        %v252 = vunpack.c.l.b16 %v228
        %v253 = vunpack.c.l.b16 %v229
        %v254 = vunpack.c.l.b16 %v230
        %v255 = vunpack.c.l.b16 %v231
        %v256 = vunpack.c.l.b16 %v232
        %v257 = vunpack.c.l.b16 %v233
        %v258 = vunpack.c.l.b16 %v234
        %v259 = vunpack.c.l.b16 %v235
        %v260 = vpack.c.b16 %v253, %v252
        %v261 = vpack.c.b16 %v255, %v254
        %v262 = vpack.c.b16 %v257, %v256
        %v263 = vpack.c.b16 %v259, %v258
        %v272 = vunpack.c.l.b16 %v236
        %v273 = vunpack.c.h.b16 %v236
        %v274 = vunpack.c.l.b16 %v237
        %v275 = vunpack.c.h.b16 %v237
        %v276 = vunpack.c.l.b16 %v238
        %v277 = vunpack.c.h.b16 %v238
        %v278 = vunpack.c.l.b16 %v239
        %v279 = vunpack.c.h.b16 %v239
        %v280 = vunpack.c.l.b16 %v240
        %v281 = vunpack.c.h.b16 %v240
        %v282 = vunpack.c.l.b16 %v241
        %v283 = vunpack.c.h.b16 %v241
        %v284 = vunpack.c.l.b16 %v242
        %v285 = vunpack.c.h.b16 %v242
        %v286 = vunpack.c.l.b16 %v243
        %v287 = vunpack.c.h.b16 %v243
        %v288 = vpack.c.b16 %v276, %v272
        %v289 = vpack.c.b16 %v277, %v273
        %v290 = vpack.c.b16 %v278, %v274
        %v291 = vpack.c.b16 %v279, %v275
        %v292 = vpack.c.b16 %v284, %v280
        %v293 = vpack.c.b16 %v285, %v281
        %v294 = vpack.c.b16 %v286, %v282
        %v295 = vpack.c.b16 %v287, %v283
        %vm304 = vcmask 261120
        %v306 = vsel %vm304, %v260, 0
        %v309 = vsel %vm304, %v261, 0
        %v312 = vsel %vm304, %v262, 0
        %v315 = vsel %vm304, %v263, 0
        %317 = vmatpush.bf16.msra.mxu0 0
        %318 = vmatpush.bf16.msra.mxu0 0
        %319 = vmatpush.bf16.msra.mxu0 0
        %320 = vmatpush.bf16.msra.mxu0 0
        %321 = vmatpush.bf16.msra.mxu0 0
        %322 = vmatpush.bf16.msra.mxu0 0
        %323 = vmatpush.bf16.msra.mxu0 %v292
        %324 = vmatpush.bf16.msra.mxu0 %v288
        %325 = vmatmul.bf16.gmra.mxu0 %v306
        %v326 = vpop.f32.mrf.mxu0
        %v327 = vadd.f32 0.0, %v326
        %v328 = vpop.f32.mrf.mxu0
        %v329 = vadd.f32 0.0, %v328
        %330 = vmatmul.bf16.gmra.mxu0 %v309
        %v331 = vpop.f32.mrf.mxu0
        %v332 = vadd.f32 0.0, %v331
        %v333 = vpop.f32.mrf.mxu0
        %v334 = vadd.f32 0.0, %v333
        %335 = vmatmul.bf16.gmra.mxu0 %v312
        %v336 = vpop.f32.mrf.mxu0
        %v337 = vadd.f32 0.0, %v336
        %v338 = vpop.f32.mrf.mxu0
        %v339 = vadd.f32 0.0, %v338
        %340 = vmatmul.bf16.gmra.mxu0 %v315
        %v341 = vpop.f32.mrf.mxu0
        %v342 = vadd.f32 0.0, %v341
        %v343 = vpop.f32.mrf.mxu0
        %v344 = vadd.f32 0.0, %v343
        %345 = vdwg.mxu0
        %346 = vmatpush.bf16.msra.mxu0 0
        %347 = vmatpush.bf16.msra.mxu0 0
        %348 = vmatpush.bf16.msra.mxu0 0
        %349 = vmatpush.bf16.msra.mxu0 0
        %350 = vmatpush.bf16.msra.mxu0 0
        %351 = vmatpush.bf16.msra.mxu0 0
        %352 = vmatpush.bf16.msra.mxu0 %v293
        %353 = vmatpush.bf16.msra.mxu0 %v289
        %354 = vmatmul.bf16.gmra.mxu0 %v306
        %v355 = vpop.f32.mrf.mxu0
        %v356 = vadd.f32 0.0, %v355
        %v357 = vpop.f32.mrf.mxu0
        %v358 = vadd.f32 0.0, %v357
        %359 = vmatmul.bf16.gmra.mxu0 %v309
        %v360 = vpop.f32.mrf.mxu0
        %v361 = vadd.f32 0.0, %v360
        %v362 = vpop.f32.mrf.mxu0
        %v363 = vadd.f32 0.0, %v362
        %364 = vmatmul.bf16.gmra.mxu0 %v312
        %v365 = vpop.f32.mrf.mxu0
        %v366 = vadd.f32 0.0, %v365
        %v367 = vpop.f32.mrf.mxu0
        %v368 = vadd.f32 0.0, %v367
        %369 = vmatmul.bf16.gmra.mxu0 %v315
        %v370 = vpop.f32.mrf.mxu0
        %v371 = vadd.f32 0.0, %v370
        %v372 = vpop.f32.mrf.mxu0
        %v373 = vadd.f32 0.0, %v372
        %374 = vdwg.mxu0
        %375 = vmatpush.bf16.msra.mxu0 0
        %376 = vmatpush.bf16.msra.mxu0 0
        %377 = vmatpush.bf16.msra.mxu0 0
        %378 = vmatpush.bf16.msra.mxu0 0
        %379 = vmatpush.bf16.msra.mxu0 0
        %380 = vmatpush.bf16.msra.mxu0 0
        %381 = vmatpush.bf16.msra.mxu0 %v294
        %382 = vmatpush.bf16.msra.mxu0 %v290
        %383 = vmatmul.bf16.gmra.mxu0 %v306
        %v384 = vpop.f32.mrf.mxu0
        %v385 = vadd.f32 0.0, %v384
        %v386 = vpop.f32.mrf.mxu0
        %v387 = vadd.f32 0.0, %v386
        %388 = vmatmul.bf16.gmra.mxu0 %v309
        %v389 = vpop.f32.mrf.mxu0
        %v390 = vadd.f32 0.0, %v389
        %v391 = vpop.f32.mrf.mxu0
        %v392 = vadd.f32 0.0, %v391
        %393 = vmatmul.bf16.gmra.mxu0 %v312
        %v394 = vpop.f32.mrf.mxu0
        %v395 = vadd.f32 0.0, %v394
        %v396 = vpop.f32.mrf.mxu0
        %v397 = vadd.f32 0.0, %v396
        %398 = vmatmul.bf16.gmra.mxu0 %v315
        %v399 = vpop.f32.mrf.mxu0
        %v400 = vadd.f32 0.0, %v399
        %v401 = vpop.f32.mrf.mxu0
        %v402 = vadd.f32 0.0, %v401
        %403 = vdwg.mxu0
        %404 = vmatpush.bf16.msra.mxu0 0
        %405 = vmatpush.bf16.msra.mxu0 0
        %406 = vmatpush.bf16.msra.mxu0 0
        %407 = vmatpush.bf16.msra.mxu0 0
        %408 = vmatpush.bf16.msra.mxu0 0
        %409 = vmatpush.bf16.msra.mxu0 0
        %410 = vmatpush.bf16.msra.mxu0 %v295
        %411 = vmatpush.bf16.msra.mxu0 %v291
        %412 = vmatmul.bf16.gmra.mxu0 %v306
        %v413 = vpop.f32.mrf.mxu0
        %v414 = vadd.f32 0.0, %v413
        %v415 = vpop.f32.mrf.mxu0
        %v416 = vadd.f32 0.0, %v415
        %417 = vmatmul.bf16.gmra.mxu0 %v309
        %v418 = vpop.f32.mrf.mxu0
        %v419 = vadd.f32 0.0, %v418
        %v420 = vpop.f32.mrf.mxu0
        %v421 = vadd.f32 0.0, %v420
        %422 = vmatmul.bf16.gmra.mxu0 %v312
        %v423 = vpop.f32.mrf.mxu0
        %v424 = vadd.f32 0.0, %v423
        %v425 = vpop.f32.mrf.mxu0
        %v426 = vadd.f32 0.0, %v425
        %427 = vmatmul.bf16.gmra.mxu0 %v315
        %v428 = vpop.f32.mrf.mxu0
        %v429 = vadd.f32 0.0, %v428
        %v430 = vpop.f32.mrf.mxu0
        %v431 = vadd.f32 0.0, %v430
        %432 = vdwg.mxu0
        %v433 = vlaneseq
        %v434 = vand.u32 %v433, 127
        %vm435 = vcmp.lt.s32.totalorder %v434, 3
        %v436 = vsel %vm435, %v414, -1e+30
        %v437 = vsel %vm435, %v416, -1e+30
        %v438 = vsel %vm435, %v419, -1e+30
        %v439 = vsel %vm435, %v421, -1e+30
        %v440 = vsel %vm435, %v424, -1e+30
        %v441 = vsel %vm435, %v426, -1e+30
        %v442 = vsel %vm435, %v429, -1e+30
        %v443 = vsel %vm435, %v431, -1e+30
        %444 = vmax.xlane.f32.xlu0 %v436
        %v445 = vpop.xlane.xlu0 %444
        %446 = vmax.xlane.f32.xlu0 %v437
        %v447 = vpop.xlane.xlu0 %446
        %448 = vmax.xlane.f32.xlu0 %v438
        %v449 = vpop.xlane.xlu0 %448
        %450 = vmax.xlane.f32.xlu0 %v439
        %v451 = vpop.xlane.xlu0 %450
        %452 = vmax.xlane.f32.xlu0 %v440
        %v453 = vpop.xlane.xlu0 %452
        %454 = vmax.xlane.f32.xlu0 %v441
        %v455 = vpop.xlane.xlu0 %454
        %456 = vmax.xlane.f32.xlu0 %v442
        %v457 = vpop.xlane.xlu0 %456
        %458 = vmax.xlane.f32.xlu0 %v443
        %v459 = vpop.xlane.xlu0 %458
        %v460 = vsub.f32 %v436, %v445
        %v461 = vsub.f32 %v437, %v447
        %v462 = vsub.f32 %v438, %v449
        %v463 = vsub.f32 %v439, %v451
        %v464 = vsub.f32 %v440, %v453
        %v465 = vsub.f32 %v441, %v455
        %v466 = vsub.f32 %v442, %v457
        %v467 = vsub.f32 %v443, %v459
        %v468 = vmul.f32 %v460, 1.442695
        %v469 = vpow.pop %v468
        %v470 = vmul.f32 %v461, 1.442695
        %v471 = vpow.pop %v470
        %v472 = vmul.f32 %v462, 1.442695
        %v473 = vpow.pop %v472
        %v474 = vmul.f32 %v463, 1.442695
        %v475 = vpow.pop %v474
        %v476 = vmul.f32 %v464, 1.442695
        %v477 = vpow.pop %v476
        %v478 = vmul.f32 %v465, 1.442695
        %v479 = vpow.pop %v478
        %v480 = vmul.f32 %v466, 1.442695
        %v481 = vpow.pop %v480
        %v482 = vmul.f32 %v467, 1.442695
        %v483 = vpow.pop %v482
        %v484 = vsel %vm435, %v469, 0.0
        %v485 = vsel %vm435, %v471, 0.0
        %v486 = vsel %vm435, %v473, 0.0
        %v487 = vsel %vm435, %v475, 0.0
        %v488 = vsel %vm435, %v477, 0.0
        %v489 = vsel %vm435, %v479, 0.0
        %v490 = vsel %vm435, %v481, 0.0
        %v491 = vsel %vm435, %v483, 0.0
        %492 = vadd.xlane.f32.xlu0 %v484
        %v493 = vpop.xlane.xlu0 %492
        %494 = vadd.xlane.f32.xlu0 %v485
        %v495 = vpop.xlane.xlu0 %494
        %496 = vadd.xlane.f32.xlu0 %v486
        %v497 = vpop.xlane.xlu0 %496
        %498 = vadd.xlane.f32.xlu0 %v487
        %v499 = vpop.xlane.xlu0 %498
        %500 = vadd.xlane.f32.xlu0 %v488
        %v501 = vpop.xlane.xlu0 %500
        %502 = vadd.xlane.f32.xlu0 %v489
        %v503 = vpop.xlane.xlu0 %502
        %504 = vadd.xlane.f32.xlu0 %v490
        %v505 = vpop.xlane.xlu0 %504
        %506 = vadd.xlane.f32.xlu0 %v491
        %v507 = vpop.xlane.xlu0 %506
        %v508 = vrcp.pop %v493
        %v509 = vmul.f32 %v493, %v508
        %v510 = vsub.f32 1.0, %v509
        %v511 = vmul.f32 %v508, %v510
        %v512 = vadd.f32 %v508, %v511
        %vm513 = vweird.f32 %v493
        %vm514 = vweird.f32 %v508
        %vm515 = vmor %vm513, %vm514
        %v516 = vsel %vm515, %v508, %v512
        %v517 = vand.u32 2147483647, %v493
        %vm518 = vcmp.eq.f32.partialorder %v517, 8.507059e+37
        %v519 = vand.u32 %v493, 2147483648
        %v520 = vor.u32 1.1754944e-38, %v519
        %v521 = vsel %vm518, %v520, %v516
        %v522 = vrcp.pop %v495
        %v523 = vmul.f32 %v495, %v522
        %v524 = vsub.f32 1.0, %v523
        %v525 = vmul.f32 %v522, %v524
        %v526 = vadd.f32 %v522, %v525
        %vm527 = vweird.f32 %v495
        %vm528 = vweird.f32 %v522
        %vm529 = vmor %vm527, %vm528
        %v530 = vsel %vm529, %v522, %v526
        %v531 = vand.u32 2147483647, %v495
        %vm532 = vcmp.eq.f32.partialorder %v531, 8.507059e+37
        %v533 = vand.u32 %v495, 2147483648
        %v534 = vor.u32 1.1754944e-38, %v533
        %v535 = vsel %vm532, %v534, %v530
        %v536 = vrcp.pop %v497
        %v537 = vmul.f32 %v497, %v536
        %v538 = vsub.f32 1.0, %v537
        %v539 = vmul.f32 %v536, %v538
        %v540 = vadd.f32 %v536, %v539
        %vm541 = vweird.f32 %v497
        %vm542 = vweird.f32 %v536
        %vm543 = vmor %vm541, %vm542
        %v544 = vsel %vm543, %v536, %v540
        %v545 = vand.u32 2147483647, %v497
        %vm546 = vcmp.eq.f32.partialorder %v545, 8.507059e+37
        %v547 = vand.u32 %v497, 2147483648
        %v548 = vor.u32 1.1754944e-38, %v547
        %v549 = vsel %vm546, %v548, %v544
        %v550 = vrcp.pop %v499
        %v551 = vmul.f32 %v499, %v550
        %v552 = vsub.f32 1.0, %v551
        %v553 = vmul.f32 %v550, %v552
        %v554 = vadd.f32 %v550, %v553
        %vm555 = vweird.f32 %v499
        %vm556 = vweird.f32 %v550
        %vm557 = vmor %vm555, %vm556
        %v558 = vsel %vm557, %v550, %v554
        %v559 = vand.u32 2147483647, %v499
        %vm560 = vcmp.eq.f32.partialorder %v559, 8.507059e+37
        %v561 = vand.u32 %v499, 2147483648
        %v562 = vor.u32 1.1754944e-38, %v561
        %v563 = vsel %vm560, %v562, %v558
        %v564 = vrcp.pop %v501
        %v565 = vmul.f32 %v501, %v564
        %v566 = vsub.f32 1.0, %v565
        %v567 = vmul.f32 %v564, %v566
        %v568 = vadd.f32 %v564, %v567
        %vm569 = vweird.f32 %v501
        %vm570 = vweird.f32 %v564
        %vm571 = vmor %vm569, %vm570
        %v572 = vsel %vm571, %v564, %v568
        %v573 = vand.u32 2147483647, %v501
        %vm574 = vcmp.eq.f32.partialorder %v573, 8.507059e+37
        %v575 = vand.u32 %v501, 2147483648
        %v576 = vor.u32 1.1754944e-38, %v575
        %v577 = vsel %vm574, %v576, %v572
        %v578 = vrcp.pop %v503
        %v579 = vmul.f32 %v503, %v578
        %v580 = vsub.f32 1.0, %v579
        %v581 = vmul.f32 %v578, %v580
        %v582 = vadd.f32 %v578, %v581
        %vm583 = vweird.f32 %v503
        %vm584 = vweird.f32 %v578
        %vm585 = vmor %vm583, %vm584
        %v586 = vsel %vm585, %v578, %v582
        %v587 = vand.u32 2147483647, %v503
        %vm588 = vcmp.eq.f32.partialorder %v587, 8.507059e+37
        %v589 = vand.u32 %v503, 2147483648
        %v590 = vor.u32 1.1754944e-38, %v589
        %v591 = vsel %vm588, %v590, %v586
        %v592 = vrcp.pop %v505
        %v593 = vmul.f32 %v505, %v592
        %v594 = vsub.f32 1.0, %v593
        %v595 = vmul.f32 %v592, %v594
        %v596 = vadd.f32 %v592, %v595
        %vm597 = vweird.f32 %v505
        %vm598 = vweird.f32 %v592
        %vm599 = vmor %vm597, %vm598
        %v600 = vsel %vm599, %v592, %v596
        %v601 = vand.u32 2147483647, %v505
        %vm602 = vcmp.eq.f32.partialorder %v601, 8.507059e+37
        %v603 = vand.u32 %v505, 2147483648
        %v604 = vor.u32 1.1754944e-38, %v603
        %v605 = vsel %vm602, %v604, %v600
        %v606 = vrcp.pop %v507
        %v607 = vmul.f32 %v507, %v606
        %v608 = vsub.f32 1.0, %v607
        %v609 = vmul.f32 %v606, %v608
        %v610 = vadd.f32 %v606, %v609
        %vm611 = vweird.f32 %v507
        %vm612 = vweird.f32 %v606
        %vm613 = vmor %vm611, %vm612
        %v614 = vsel %vm613, %v606, %v610
        %v615 = vand.u32 2147483647, %v507
        %vm616 = vcmp.eq.f32.partialorder %v615, 8.507059e+37
        %v617 = vand.u32 %v507, 2147483648
        %v618 = vor.u32 1.1754944e-38, %v617
        %v619 = vsel %vm616, %v618, %v614
        %v620 = vmul.f32 %v484, %v521
        %v621 = vmul.f32 %v485, %v535
        %v622 = vmul.f32 %v486, %v549
        %v623 = vmul.f32 %v487, %v563
        %v624 = vmul.f32 %v488, %v577
        %v625 = vmul.f32 %v489, %v591
        %v626 = vmul.f32 %v490, %v605
        %v627 = vmul.f32 %v491, %v619
        %v628 = vcvt.s32.f32 %v434
        %vm629 = vcmp.eq.f32.partialorder %v436, %v445
        %vm630 = vcmp.eq.f32.partialorder %v437, %v447
        %vm631 = vcmp.eq.f32.partialorder %v438, %v449
        %vm632 = vcmp.eq.f32.partialorder %v439, %v451
        %vm633 = vcmp.eq.f32.partialorder %v440, %v453
        %vm634 = vcmp.eq.f32.partialorder %v441, %v455
        %vm635 = vcmp.eq.f32.partialorder %v442, %v457
        %vm636 = vcmp.eq.f32.partialorder %v443, %v459
        %v637 = vsel %vm629, %v628, 128.0
        %v638 = vsel %vm630, %v628, 128.0
        %v639 = vsel %vm631, %v628, 128.0
        %v640 = vsel %vm632, %v628, 128.0
        %v641 = vsel %vm633, %v628, 128.0
        %v642 = vsel %vm634, %v628, 128.0
        %v643 = vsel %vm635, %v628, 128.0
        %v644 = vsel %vm636, %v628, 128.0
        %645 = vmin.xlane.f32.xlu0 %v637
        %v646 = vpop.xlane.xlu0 %645
        %647 = vmin.xlane.f32.xlu0 %v638
        %v648 = vpop.xlane.xlu0 %647
        %649 = vmin.xlane.f32.xlu0 %v639
        %v650 = vpop.xlane.xlu0 %649
        %651 = vmin.xlane.f32.xlu0 %v640
        %v652 = vpop.xlane.xlu0 %651
        %653 = vmin.xlane.f32.xlu0 %v641
        %v654 = vpop.xlane.xlu0 %653
        %655 = vmin.xlane.f32.xlu0 %v642
        %v656 = vpop.xlane.xlu0 %655
        %657 = vmin.xlane.f32.xlu0 %v643
        %v658 = vpop.xlane.xlu0 %657
        %659 = vmin.xlane.f32.xlu0 %v644
        %v660 = vpop.xlane.xlu0 %659
        %vm661 = vcmp.eq.f32.partialorder %v628, %v646
        %vm662 = vcmp.eq.f32.partialorder %v628, %v648
        %vm663 = vcmp.eq.f32.partialorder %v628, %v650
        %vm664 = vcmp.eq.f32.partialorder %v628, %v652
        %vm665 = vcmp.eq.f32.partialorder %v628, %v654
        %vm666 = vcmp.eq.f32.partialorder %v628, %v656
        %vm667 = vcmp.eq.f32.partialorder %v628, %v658
        %vm668 = vcmp.eq.f32.partialorder %v628, %v660
        %v669 = vsel %vm661, 1, 0
        %v670 = vsel %vm662, 1, 0
        %v671 = vsel %vm663, 1, 0
        %v672 = vsel %vm664, 1, 0
        %v673 = vsel %vm665, 1, 0
        %v674 = vsel %vm666, 1, 0
        %v675 = vsel %vm667, 1, 0
        %v676 = vsel %vm668, 1, 0
        %v677 = vcvt.s32.f32 %v669
        %v678 = vcvt.s32.f32 %v670
        %v679 = vcvt.s32.f32 %v671
        %v680 = vcvt.s32.f32 %v672
        %v681 = vcvt.s32.f32 %v673
        %v682 = vcvt.s32.f32 %v674
        %v683 = vcvt.s32.f32 %v675
        %v684 = vcvt.s32.f32 %v676
        %v685 = vmul.f32 %v677, %v521
        %v686 = vmul.f32 %v678, %v535
        %v687 = vmul.f32 %v679, %v549
        %v688 = vmul.f32 %v680, %v563
        %v689 = vmul.f32 %v681, %v577
        %v690 = vmul.f32 %v682, %v591
        %v691 = vmul.f32 %v683, %v605
        %v692 = vmul.f32 %v684, %v619
        %v693 = vpack.c.bf16 %v686, %v685
        %v694 = vpack.c.bf16 %v688, %v687
        %v695 = vpack.c.bf16 %v690, %v689
        %v696 = vpack.c.bf16 %v692, %v691
        %v697 = vld [vmem:[#allocation2] sm:$0xf]
        %v698 = vld [vmem:[#allocation2 + $0x4] sm:$0xf]
        %v699 = vld [vmem:[#allocation2 + $0x8] sm:$0xf]
        %v700 = vld [vmem:[#allocation2 + $0xc] sm:$0xf]
        %v701 = vld [vmem:[#allocation2 + $0x10] sm:$0xf]
        %v702 = vld [vmem:[#allocation2 + $0x14] sm:$0xf]
        %v703 = vld [vmem:[#allocation2 + $0x18] sm:$0xf]
        %v704 = vld [vmem:[#allocation2 + $0x1c] sm:$0xf]
        %v705 = vld [vmem:[#allocation2 + $0x20] sm:$0xf]
        %v706 = vld [vmem:[#allocation2 + $0x24] sm:$0xf]
        %v707 = vld [vmem:[#allocation2 + $0x28] sm:$0xf]
        %v708 = vld [vmem:[#allocation2 + $0x2c] sm:$0xf]
        %v709 = vld [vmem:[#allocation2 + $0x30] sm:$0xf]
        %v710 = vld [vmem:[#allocation2 + $0x34] sm:$0xf]
        %v711 = vld [vmem:[#allocation2 + $0x38] sm:$0xf]
        %v712 = vld [vmem:[#allocation2 + $0x3c] sm:$0xf]
        %714 = vset.pattern.permute.xlu0 0
        %715 = vperm.xlu0 %714, %v685
        %v716 = vpop.permute.xlu0 %715
        %719 = vset.pattern.permute.xlu0 0
        %720 = vperm.xlu0 %719, %v686
        %v721 = vpop.permute.xlu0 %720
        %724 = vset.pattern.permute.xlu0 0
        %725 = vperm.xlu0 %724, %v687
        %v726 = vpop.permute.xlu0 %725
        %729 = vset.pattern.permute.xlu0 0
        %730 = vperm.xlu0 %729, %v688
        %v731 = vpop.permute.xlu0 %730
        %734 = vset.pattern.permute.xlu0 0
        %735 = vperm.xlu0 %734, %v689
        %v736 = vpop.permute.xlu0 %735
        %739 = vset.pattern.permute.xlu0 0
        %740 = vperm.xlu0 %739, %v690
        %v741 = vpop.permute.xlu0 %740
        %744 = vset.pattern.permute.xlu0 0
        %745 = vperm.xlu0 %744, %v691
        %v746 = vpop.permute.xlu0 %745
        %749 = vset.pattern.permute.xlu0 0
        %750 = vperm.xlu0 %749, %v692
        %v751 = vpop.permute.xlu0 %750
        %v753 = vmul.f32 %v716, %v327
        %v754 = vmul.f32 %v721, %v329
        %v755 = vmul.f32 %v726, %v332
        %v756 = vmul.f32 %v731, %v334
        %v757 = vmul.f32 %v736, %v337
        %v758 = vmul.f32 %v741, %v339
        %v759 = vmul.f32 %v746, %v342
        %v760 = vmul.f32 %v751, %v344
        %v777 = vunpack.c.l.b16 %v697
        %v778 = vunpack.c.l.b16 %v698
        %v779 = vunpack.c.l.b16 %v699
        %v780 = vunpack.c.l.b16 %v700
        %v781 = vunpack.c.l.b16 %v701
        %v782 = vunpack.c.l.b16 %v702
        %v783 = vunpack.c.l.b16 %v703
        %v784 = vunpack.c.l.b16 %v704
        %v785 = vunpack.c.l.b16 %v705
        %v786 = vunpack.c.l.b16 %v706
        %v787 = vunpack.c.l.b16 %v707
        %v788 = vunpack.c.l.b16 %v708
        %v789 = vunpack.c.l.b16 %v709
        %v790 = vunpack.c.l.b16 %v710
        %v791 = vunpack.c.l.b16 %v711
        %v792 = vunpack.c.l.b16 %v712
        %v793 = vpack.c.b16 %v778, %v777
        %v794 = vpack.c.b16 %v780, %v779
        %v795 = vpack.c.b16 %v782, %v781
        %v796 = vpack.c.b16 %v784, %v783
        %v797 = vpack.c.b16 %v786, %v785
        %v798 = vpack.c.b16 %v788, %v787
        %v799 = vpack.c.b16 %v790, %v789
        %v800 = vpack.c.b16 %v792, %v791
        %809 = vmatpush.bf16.msra.mxu0 %v800
        %810 = vmatpush.bf16.msra.mxu0 %v799
        %811 = vmatpush.bf16.msra.mxu0 %v798
        %812 = vmatpush.bf16.msra.mxu0 %v797
        %813 = vmatpush.bf16.msra.mxu0 %v796
        %814 = vmatpush.bf16.msra.mxu0 %v795
        %815 = vmatpush.bf16.msra.mxu0 %v794
        %816 = vmatpush.bf16.msra.mxu0 %v793
        %817 = vmatmul.bf16.gmra.mxu0 %v693
        %v818 = vpop.f32.mrf.mxu0
        %v819 = vadd.f32 %v753, %v818
        %v820 = vpop.f32.mrf.mxu0
        %v821 = vadd.f32 %v754, %v820
        %822 = vmatmul.bf16.gmra.mxu0 %v694
        %v823 = vpop.f32.mrf.mxu0
        %v824 = vadd.f32 %v755, %v823
        %v825 = vpop.f32.mrf.mxu0
        %v826 = vadd.f32 %v756, %v825
        %827 = vmatmul.bf16.gmra.mxu0 %v695
        %v828 = vpop.f32.mrf.mxu0
        %v829 = vadd.f32 %v757, %v828
        %v830 = vpop.f32.mrf.mxu0
        %v831 = vadd.f32 %v758, %v830
        %832 = vmatmul.bf16.gmra.mxu0 %v696
        %v833 = vpop.f32.mrf.mxu0
        %v834 = vadd.f32 %v759, %v833
        %v835 = vpop.f32.mrf.mxu0
        %v836 = vadd.f32 %v760, %v835
        %837 = vdwg.mxu0
        %838 = vset.pattern.permute.xlu0 1
        %839 = vperm.xlu0 %838, %v685
        %v840 = vpop.permute.xlu0 %839
        %842 = vset.pattern.permute.xlu0 1
        %843 = vperm.xlu0 %842, %v686
        %v844 = vpop.permute.xlu0 %843
        %846 = vset.pattern.permute.xlu0 1
        %847 = vperm.xlu0 %846, %v687
        %v848 = vpop.permute.xlu0 %847
        %850 = vset.pattern.permute.xlu0 1
        %851 = vperm.xlu0 %850, %v688
        %v852 = vpop.permute.xlu0 %851
        %854 = vset.pattern.permute.xlu0 1
        %855 = vperm.xlu0 %854, %v689
        %v856 = vpop.permute.xlu0 %855
        %858 = vset.pattern.permute.xlu0 1
        %859 = vperm.xlu0 %858, %v690
        %v860 = vpop.permute.xlu0 %859
        %862 = vset.pattern.permute.xlu0 1
        %863 = vperm.xlu0 %862, %v691
        %v864 = vpop.permute.xlu0 %863
        %866 = vset.pattern.permute.xlu0 1
        %867 = vperm.xlu0 %866, %v692
        %v868 = vpop.permute.xlu0 %867
        %v870 = vmul.f32 %v840, %v356
        %v871 = vmul.f32 %v844, %v358
        %v872 = vmul.f32 %v848, %v361
        %v873 = vmul.f32 %v852, %v363
        %v874 = vmul.f32 %v856, %v366
        %v875 = vmul.f32 %v860, %v368
        %v876 = vmul.f32 %v864, %v371
        %v877 = vmul.f32 %v868, %v373
        %v878 = vadd.f32 %v819, %v870
        %v879 = vadd.f32 %v821, %v871
        %v880 = vadd.f32 %v824, %v872
        %v881 = vadd.f32 %v826, %v873
        %v882 = vadd.f32 %v829, %v874
        %v883 = vadd.f32 %v831, %v875
        %v884 = vadd.f32 %v834, %v876
        %v885 = vadd.f32 %v836, %v877
        %886 = vset.pattern.permute.xlu0 2
        %887 = vperm.xlu0 %886, %v685
        %v888 = vpop.permute.xlu0 %887
        %890 = vset.pattern.permute.xlu0 2
        %891 = vperm.xlu0 %890, %v686
        %v892 = vpop.permute.xlu0 %891
        %894 = vset.pattern.permute.xlu0 2
        %895 = vperm.xlu0 %894, %v687
        %v896 = vpop.permute.xlu0 %895
        %898 = vset.pattern.permute.xlu0 2
        %899 = vperm.xlu0 %898, %v688
        %v900 = vpop.permute.xlu0 %899
        %902 = vset.pattern.permute.xlu0 2
        %903 = vperm.xlu0 %902, %v689
        %v904 = vpop.permute.xlu0 %903
        %906 = vset.pattern.permute.xlu0 2
        %907 = vperm.xlu0 %906, %v690
        %v908 = vpop.permute.xlu0 %907
        %910 = vset.pattern.permute.xlu0 2
        %911 = vperm.xlu0 %910, %v691
        %v912 = vpop.permute.xlu0 %911
        %914 = vset.pattern.permute.xlu0 2
        %915 = vperm.xlu0 %914, %v692
        %v916 = vpop.permute.xlu0 %915
        %v918 = vmul.f32 %v888, %v385
        %v919 = vmul.f32 %v892, %v387
        %v920 = vmul.f32 %v896, %v390
        %v921 = vmul.f32 %v900, %v392
        %v922 = vmul.f32 %v904, %v395
        %v923 = vmul.f32 %v908, %v397
        %v924 = vmul.f32 %v912, %v400
        %v925 = vmul.f32 %v916, %v402
        %v926 = vadd.f32 %v878, %v918
        %v927 = vadd.f32 %v879, %v919
        %v928 = vadd.f32 %v880, %v920
        %v929 = vadd.f32 %v881, %v921
        %v930 = vadd.f32 %v882, %v922
        %v931 = vadd.f32 %v883, %v923
        %v932 = vadd.f32 %v884, %v924
        %v933 = vadd.f32 %v885, %v925
        %934 = vst [vmem:[%s212] sm:$0xff] %v926
        %935 = vst [vmem:[%s212 + $0x8] sm:$0xff] %v927
        %936 = vst [vmem:[%s212 + $0x10] sm:$0xff] %v928
        %937 = vst [vmem:[%s212 + $0x18] sm:$0xff] %v929
        %938 = vst [vmem:[%s212 + $0x20] sm:$0xff] %v930
        %939 = vst [vmem:[%s212 + $0x28] sm:$0xff] %v931
        %940 = vst [vmem:[%s212 + $0x30] sm:$0xff] %v932
        %941 = vst [vmem:[%s212 + $0x38] sm:$0xff] %v933
        %v942 = vadd.f32 %v620, %v621
        %v943 = vadd.f32 %v942, %v622
        %v944 = vadd.f32 %v943, %v623
        %v945 = vadd.f32 %v944, %v624
        %v946 = vadd.f32 %v945, %v625
        %v947 = vadd.f32 %v946, %v626
        %v948 = vadd.f32 %v947, %v627
        %v949 = vrot.slane %v948, 4
        %v950 = vadd.f32 %v948, %v949
        %v951 = vrot.slane %v950, 2
        %v952 = vadd.f32 %v950, %v951
        %v953 = vrot.slane %v952, 1
        %v954 = vadd.f32 %v952, %v953
        %v955 = vadd.f32 %v677, %v678
        %v956 = vadd.f32 %v955, %v679
        %v957 = vadd.f32 %v956, %v680
        %v958 = vadd.f32 %v957, %v681
        %v959 = vadd.f32 %v958, %v682
        %v960 = vadd.f32 %v959, %v683
        %v961 = vadd.f32 %v960, %v684
        %v962 = vrot.slane %v961, 4
        %v963 = vadd.f32 %v961, %v962
        %v964 = vrot.slane %v963, 2
        %v965 = vadd.f32 %v963, %v964
        %v966 = vrot.slane %v965, 1
        %v967 = vadd.f32 %v965, %v966
        %vm968 = vcmask 1040384
        %v969 = vsel %vm968, %v954, %v967
        %970 = vst [vmem:[%s219] sm:$0x3] %v969
        %s971 = sand.u32 %s99, 1
        %s972 = scalar_lea.sflag [#allocation4], %s971
        %s973 = sand.u32 %s99, 1
        %s974 = smul.addr %s973, 64
        %s975 = scalar_lea.vmem [#allocation5], %s974
        %s976 = sand.u32 %s125, 1
        %s977 = scalar_lea.sflag [#allocation7], %s976
        %s978 = sand.u32 %s125, 1
        %s979 = smul.addr %s978, 2
        %s980 = scalar_lea.vmem [#allocation6], %s979
        // Predicated region
        $region37: #{tpu_custom_call.1} parent=31 // pred_check
          %p981 = pneg %p109
        $region38: #{tpu_custom_call.1} parent=31 // pred_check_branch
          %983 = sbr.rel (%p981) target = $region40
        $region39: #{tpu_custom_call.1} parent=31 // pred_region
          %s984 = smul.u32 8, %s23
          %986 = vsyncadd %s972, 0
          %s987 = smul.addr %s984, 8
          %s988 = scalar_lea.hbm %s3, %s987
          %s989 = sshll.u32 %s975, 4
          %s990 = int_to_ptr.vmem [resolvable:$true] %s989
          %s991 = sshll.u32 %s988, 4
          %s992 = int_to_ptr.hbm [resolvable:$true] %s991
          %997 = dma.vmem_to_hbm [thread:$0]  %s990, 1024, %s992, %s972, 128, 128, 8
        $region40: #{tpu_custom_call.1} parent=31 // pred_fallthru
          _
        // Predicated region
        $region41: #{tpu_custom_call.1} parent=31 // pred_check
          %p998 = pneg %p135
        $region42: #{tpu_custom_call.1} parent=31 // pred_check_branch
          %1000 = sbr.rel (%p998) target = $region44
        $region43: #{tpu_custom_call.1} parent=31 // pred_region
          %1002 = vsyncadd %s977, 0
          %s1003 = smul.addr %s23, 2
          %s1004 = scalar_lea.hbm %s4, %s1003
          %s1006 = sshll.u32 %s980, 4
          %s1007 = int_to_ptr.vmem [resolvable:$true] %s1006
          %s1008 = sshll.u32 %s1004, 4
          %s1009 = int_to_ptr.hbm [resolvable:$true] %s1008
          %1011 = dma.vmem_to_hbm [thread:$0]  %s1007, 32, %s1009, %s977
        $region44: #{tpu_custom_call.1} parent=31 // pred_fallthru
          _
      $region32: #{tpu_custom_call.1} parent=5 // pred_fallthru
        _
      %p1012 = scmp.le.s32.totalorder 2, %s18
      // Predicated region
      $region45: #{tpu_custom_call.1} parent=5 // pred_check
        %p1013 = pneg %p1012
      $region46: #{tpu_custom_call.1} parent=5 // pred_check_branch
        %1015 = sbr.rel (%p1013) target = $region48
      $region47: #{tpu_custom_call.1} parent=5 // pred_region
        %s1016 = ssub.s32 %s18, 2
        // Predicated region
        $region49: #{tpu_custom_call.1} parent=47 // pred_check
          %p1017 = pneg %p115
        $region50: #{tpu_custom_call.1} parent=47 // pred_check_branch
          %1019 = sbr.rel (%p1017) target = $region52
        $region51: #{tpu_custom_call.1} parent=47 // pred_region
          %s1020 = sand.u32 %s100, 1
          %s1021 = scalar_lea.sflag [#allocation4], %s1020
          %s1022 = sand.u32 %s100, 1
          %s1023 = smul.addr %s1022, 64
          %s1024 = scalar_lea.vmem [#allocation5], %s1023
          %1026 = dma.done %s1021, 1024
        $region52: #{tpu_custom_call.1} parent=47 // pred_fallthru
          _
        // Predicated region
        $region53: #{tpu_custom_call.1} parent=47 // pred_check
          %p1027 = pneg %p141
        $region54: #{tpu_custom_call.1} parent=47 // pred_check_branch
          %1029 = sbr.rel (%p1027) target = $region56
        $region55: #{tpu_custom_call.1} parent=47 // pred_region
          %s1030 = sand.u32 %s126, 1
          %s1031 = scalar_lea.sflag [#allocation7], %s1030
          %s1032 = sand.u32 %s126, 1
          %s1033 = smul.addr %s1032, 2
          %s1034 = scalar_lea.vmem [#allocation6], %s1033
          %1036 = dma.done %s1031, 32
        $region56: #{tpu_custom_call.1} parent=47 // pred_fallthru
          _
      $region48: #{tpu_custom_call.1} parent=5 // pred_fallthru
        _
    $region6: #{tpu_custom_call.1} parent=1 // loop_footer
      %s22 = sadd.s32 1, %s18
    $region7: #{tpu_custom_call.1} parent=1 // loop_footer_branch
      %17 = sbr.rel target = $region3
    $region8: #{tpu_custom_call.1} parent=1 // loop_exit
      _
    %1037 = vsyncpa [#allocation3], 1
    %s1038 = scalar_lea.sflag [#allocation3], 1
    %1039 = vsyncpa %s1038, 1
    %1040 = vsyncpa [#allocation4], 1
    %s1041 = scalar_lea.sflag [#allocation4], 1
    %1042 = vsyncpa %s1041, 1
    %1043 = vsyncpa [#allocation7], 1
    %s1044 = scalar_lea.sflag [#allocation7], 1
    %1045 = vsyncpa %s1044, 1

</llo_original>
